<compile_context>
chip_gen: v6e
topology: v6e:2x2x1
jax: 0.10.0
libtpu: 0.0.40
codegen_flags: <defaults>
</compile_context>

<pallas_src>
import functools
import math

import numpy as np
import jax
import jax.numpy as jnp
from jax.experimental import pallas as pl
from jax.experimental.pallas import tpu as pltpu

C1 = 16    # conv1 out channels (from the module)
C2 = 8     # conv2 out channels (from the module)
KH = 3     # kernel size (from the module)
LANE = 128


def _round_up(v, m):
    return (v + m - 1) // m * m


# ----------------------------- fused Pallas kernel -----------------------------
def _cnn_fused_kernel(x_ref, w1_ref, b1_ref, w2_ref, b2_ref, wf_ref, bf_ref, o_ref):
    """One grid step == BB images; everything stays resident in VMEM/vregs.

    x_ref : (BB, K1)   bf16   NCHW-flattened images (K1 = Cin*H*W)
    w1_ref: (K1, N1p)  bf16   dense banded conv1 (N1p = pad128(H*W*C1))
    w2_ref: (N1p, N2p) bf16   dense banded conv2 (N2p = pad128(h2*h2*C2))
    wf_ref: (N2p, ODp) bf16   fc weights, rows permuted to (h, w, c) order
    b*_ref: (1, N*)    f32    per-column biases (zero in padded columns)
    o_ref : (BB, ODp)  f32    lane-dense output slab
    """
    y1 = jnp.dot(x_ref[...], w1_ref[...], preferred_element_type=jnp.float32)
    y1 = jnp.maximum(y1 + b1_ref[...], 0.0)                       # (BB, N1p) f32

    y2 = jnp.dot(y1.astype(jnp.bfloat16), w2_ref[...],
                 preferred_element_type=jnp.float32)
    y2 = jnp.maximum(y2 + b2_ref[...], 0.0)                       # (BB, N2p) f32

    out = jnp.dot(y2.astype(jnp.bfloat16), wf_ref[...],
                  preferred_element_type=jnp.float32)
    o_ref[...] = out + bf_ref[...]                                # (BB, ODp) f32


# ------------------------- host-side weight re-packing -------------------------
def pack_params(p, input_channels, output_dim, range_size):
    h1 = 2 * range_size + 1          # conv1 output spatial (== input spatial, pad=1)
    h2 = h1 - 2                      # conv2 output spatial (pad=0)
    cin = input_channels
    K1 = cin * h1 * h1
    n1 = h1 * h1 * C1
    n2 = h2 * h2 * C2
    N1p = _round_up(n1, LANE)
    N2p = _round_up(n2, LANE)
    ODp = _round_up(output_dim, LANE)

    # conv1 -> dense (K1, N1p): rows = NCHW flatten (c, h, w), cols = (oh, ow, f).
    # Out-of-range taps (the padding=1 ring) simply have no row -> implicit zero pad.
    w1 = np.asarray(p["conv1_w"], np.float32)                     # (C1, cin, 3, 3)
    W1 = np.zeros((K1, N1p), np.float32)
    for oh in range(h1):
        for ow in range(h1):
            col = (oh * h1 + ow) * C1
            for ki in range(KH):
                ih = oh + ki - 1
                if not 0 <= ih < h1:
                    continue
                for kj in range(KH):
                    iw = ow + kj - 1
                    if not 0 <= iw < h1:
                        continue
                    rows = np.arange(cin) * (h1 * h1) + ih * h1 + iw
                    W1[rows, col:col + C1] = w1[:, :, ki, kj].T   # (cin, C1)
    b1r = np.zeros((1, N1p), np.float32)
    b1r[0, :n1] = np.tile(np.asarray(p["conv1_b"], np.float32), h1 * h1)

    # conv2 -> dense (N1p, N2p): input cols (oh1, ow1, f), output cols (oh2, ow2, g).
    w2 = np.asarray(p["conv2_w"], np.float32)                     # (C2, C1, 3, 3)
    W2 = np.zeros((N1p, N2p), np.float32)
    for oh in range(h2):
        for ow in range(h2):
            col = (oh * h2 + ow) * C2
            for ki in range(KH):
                for kj in range(KH):
                    row = ((oh + ki) * h1 + (ow + kj)) * C1
                    W2[row:row + C1, col:col + C2] = w2[:, :, ki, kj].T   # (C1, C2)
    b2r = np.zeros((1, N2p), np.float32)
    b2r[0, :n2] = np.tile(np.asarray(p["conv2_b"], np.float32), h2 * h2)

    # fc: torch flatten order is (g, oh, ow); our y2 columns are (oh, ow, g).
    fcw = np.asarray(p["fc_w"], np.float32).reshape(output_dim, C2, h2, h2)
    Wf = np.zeros((N2p, ODp), np.float32)
    Wf[:n2, :output_dim] = fcw.transpose(2, 3, 1, 0).reshape(n2, output_dim)
    bfr = np.zeros((1, ODp), np.float32)
    bfr[0, :output_dim] = np.asarray(p["fc_b"], np.float32)

    return {
        "W1": jnp.asarray(W1, jnp.bfloat16), "b1": jnp.asarray(b1r),
        "W2": jnp.asarray(W2, jnp.bfloat16), "b2": jnp.asarray(b2r),
        "Wf": jnp.asarray(Wf, jnp.bfloat16), "bf": jnp.asarray(bfr),
    }


# ----------------------------------- wrapper -----------------------------------
@functools.partial(jax.jit, static_argnums=(2,))
def cnn_forward(packed, x, output_dim):
    """x: (B, Cin, H, W) NCHW with H == W == 2*range_size+1 -> (B, output_dim)."""
    B, cin, H, W = x.shape
    assert H == W
    K1 = packed["W1"].shape[0]
    N1p = packed["W1"].shape[1]
    N2p = packed["W2"].shape[1]
    ODp = packed["Wf"].shape[1]
    assert cin * H * W == K1

    # Batch blocking: fold BB images into the matmul M dimension per grid step.
    BB = 128 if B >= 128 else _round_up(max(B, 1), 8)
    B_pad = _round_up(B, BB)

    # Only layout op on x: contiguous NCHW flatten + bf16 cast (+ batch zero-pad).
    x_flat = x.reshape(B, K1).astype(jnp.bfloat16)
    if B_pad != B:
        x_flat = jnp.pad(x_flat, ((0, B_pad - B), (0, 0)))

    flops = int(2 * B_pad * (K1 * N1p + N1p * N2p + N2p * ODp))
    bytes_accessed = int(2 * (x_flat.size + packed["W1"].size + packed["W2"].size
                              + packed["Wf"].size)
                         + 4 * (N1p + N2p + ODp + B_pad * ODp))

    out = pl.pallas_call(
        _cnn_fused_kernel,
        out_shape=jax.ShapeDtypeStruct((B_pad, ODp), jnp.float32),
        grid=(B_pad // BB,),
        in_specs=[
            pl.BlockSpec((BB, K1), lambda i: (i, 0)),
            pl.BlockSpec(packed["W1"].shape, lambda i: (0, 0)),
            pl.BlockSpec(packed["b1"].shape, lambda i: (0, 0)),
            pl.BlockSpec(packed["W2"].shape, lambda i: (0, 0)),
            pl.BlockSpec(packed["b2"].shape, lambda i: (0, 0)),
            pl.BlockSpec(packed["Wf"].shape, lambda i: (0, 0)),
            pl.BlockSpec(packed["bf"].shape, lambda i: (0, 0)),
        ],
        out_specs=pl.BlockSpec((BB, ODp), lambda i: (i, 0)),
        compiler_params=pltpu.CompilerParams(dimension_semantics=("parallel",)),
        cost_estimate=pl.CostEstimate(flops=flops, transcendentals=0,
                                      bytes_accessed=bytes_accessed),
    )(x_flat, packed["W1"], packed["b1"], packed["W2"], packed["b2"],
      packed["Wf"], packed["bf"])
    return out[:B, :output_dim]


# ------------------------------ params & reference ------------------------------
def init_params(key, input_channels, output_dim, range_size):
    h2 = 2 * range_size - 1
    ks = jax.random.split(key, 6)

    def u(kk, shape, fan_in):
        bound = 1.0 / math.sqrt(fan_in)
        return jax.random.uniform(kk, shape, jnp.float32, -bound, bound)

    return {
        "conv1_w": u(ks[0], (C1, input_channels, KH, KH), input_channels * KH * KH),
        "conv1_b": u(ks[1], (C1,), input_channels * KH * KH),
        "conv2_w": u(ks[2], (C2, C1, KH, KH), C1 * KH * KH),
        "conv2_b": u(ks[3], (C2,), C1 * KH * KH),
        "fc_w": u(ks[4], (output_dim, C2 * h2 * h2), C2 * h2 * h2),
        "fc_b": u(ks[5], (output_dim,), C2 * h2 * h2),
    }


def reference_forward(p, x):
    """Pure-JAX (lax.conv) reference of the PyTorch forward, f32 highest precision."""
    dn = ("NCHW", "OIHW", "NCHW")
    hi = jax.lax.Precision.HIGHEST
    y = jax.lax.conv_general_dilated(x, p["conv1_w"], (1, 1), ((1, 1), (1, 1)),
                                     dimension_numbers=dn, precision=hi)
    y = jnp.maximum(y + p["conv1_b"][None, :, None, None], 0.0)
    y = jax.lax.conv_general_dilated(y, p["conv2_w"], (1, 1), ((0, 0), (0, 0)),
                                     dimension_numbers=dn, precision=hi)
    y = jnp.maximum(y + p["conv2_b"][None, :, None, None], 0.0)
    y = y.reshape(y.shape[0], -1)
    return jnp.dot(y, p["fc_w"].T, precision=hi) + p["fc_b"]


# ------------------------------------- main -------------------------------------
if __name__ == "__main__":
    input_channels, output_dim, range_size = 10, 10, 3
    H = 2 * range_size + 1   # 7: conv2 output spatial is (2*range_size-1)^2 as fc expects

    key = jax.random.PRNGKey(0)
    kp, kx1, kx2 = jax.random.split(key, 3)
    params = init_params(kp, input_channels, output_dim, range_size)
    packed = pack_params(params, input_channels, output_dim, range_size)

    # small batch (single grid step) + a batch that exercises blocking & batch padding
    for kx, B in ((kx1, 2), (kx2, 130)):
        x = jax.random.normal(kx, (B, input_channels, H, H), jnp.float32)
        out = jax.block_until_ready(cnn_forward(packed, x, output_dim))
        assert out.shape == (B, output_dim) and out.dtype == jnp.float32
        ref = reference_forward(params, x)
        np.testing.assert_allclose(np.asarray(out), np.asarray(ref),
                                   rtol=5e-2, atol=3e-2)
    print("KERNEL_OK")
</pallas_src>

<mosaic_0001>
module attributes {stable_mosaic.version = 11 : i64} {
  func.func @_cnn_fused_kernel(%arg0: i32, %arg1: memref<8x490xbf16, #tpu.memory_space<vmem>>, %arg2: memref<490x896xbf16, #tpu.memory_space<vmem>>, %arg3: memref<1x896xf32, #tpu.memory_space<vmem>>, %arg4: memref<896x256xbf16, #tpu.memory_space<vmem>>, %arg5: memref<1x256xf32, #tpu.memory_space<vmem>>, %arg6: memref<256x128xbf16, #tpu.memory_space<vmem>>, %arg7: memref<1x128xf32, #tpu.memory_space<vmem>>, %arg8: memref<8x128xf32, #tpu.memory_space<vmem>>) attributes {dimension_semantics = [#tpu.dimension_semantics<parallel>], iteration_bounds = array<i64: 1>, scalar_prefetch = 0 : i64, scratch_operands = 0 : i64, tpu.core_type = #tpu.core_type<tc>, window_params = [{transform_indices = @transform_0, window_bounds = array<i64: 8, 490>}, {pipeline_mode = #tpu.pipeline_mode<synchronous>, transform_indices = @transform_1, window_bounds = array<i64: 490, 896>}, {pipeline_mode = #tpu.pipeline_mode<synchronous>, transform_indices = @transform_2, window_bounds = array<i64: 1, 896>}, {pipeline_mode = #tpu.pipeline_mode<synchronous>, transform_indices = @transform_3, window_bounds = array<i64: 896, 256>}, {pipeline_mode = #tpu.pipeline_mode<synchronous>, transform_indices = @transform_4, window_bounds = array<i64: 1, 256>}, {pipeline_mode = #tpu.pipeline_mode<synchronous>, transform_indices = @transform_5, window_bounds = array<i64: 256, 128>}, {pipeline_mode = #tpu.pipeline_mode<synchronous>, transform_indices = @transform_6, window_bounds = array<i64: 1, 128>}, {transform_indices = @transform_7, window_bounds = array<i64: 8, 128>}]} {
    %c0 = arith.constant 0 : index
    %c0_0 = arith.constant 0 : index
    %0 = vector.load %arg1[%c0, %c0_0] : memref<8x490xbf16, #tpu.memory_space<vmem>>, vector<8x490xbf16>
    %c0_1 = arith.constant 0 : index
    %c0_2 = arith.constant 0 : index
    %1 = vector.load %arg2[%c0_1, %c0_2] : memref<490x896xbf16, #tpu.memory_space<vmem>>, vector<490x896xbf16>
    %cst = arith.constant dense<0.000000e+00> : vector<8x896xf32>
    %2 = tpu.matmul %0, %1, %cst {dimension_numbers = #tpu.dot_dimension_numbers<[1], [0], [0], [1], [0, 0, 1, 1], [], []>} : vector<8x490xbf16>, vector<490x896xbf16>, vector<8x896xf32> -> vector<8x896xf32>
    %c0_3 = arith.constant 0 : index
    %c0_4 = arith.constant 0 : index
    %3 = vector.load %arg3[%c0_3, %c0_4] : memref<1x896xf32, #tpu.memory_space<vmem>>, vector<1x896xf32>
    %4 = vector.broadcast %3 : vector<1x896xf32> to vector<8x896xf32>
    %5 = arith.addf %2, %4 : vector<8x896xf32>
    %cst_5 = arith.constant 0.000000e+00 : f32
    %6 = vector.broadcast %cst_5 : f32 to vector<8x896xf32>
    %7 = arith.maximumf %5, %6 : vector<8x896xf32>
    %8 = arith.truncf %7 : vector<8x896xf32> to vector<8x896xbf16>
    %c0_6 = arith.constant 0 : index
    %c0_7 = arith.constant 0 : index
    %9 = vector.load %arg4[%c0_6, %c0_7] : memref<896x256xbf16, #tpu.memory_space<vmem>>, vector<896x256xbf16>
    %cst_8 = arith.constant dense<0.000000e+00> : vector<8x256xf32>
    %10 = tpu.matmul %8, %9, %cst_8 {dimension_numbers = #tpu.dot_dimension_numbers<[1], [0], [0], [1], [0, 0, 1, 1], [], []>} : vector<8x896xbf16>, vector<896x256xbf16>, vector<8x256xf32> -> vector<8x256xf32>
    %c0_9 = arith.constant 0 : index
    %c0_10 = arith.constant 0 : index
    %11 = vector.load %arg5[%c0_9, %c0_10] : memref<1x256xf32, #tpu.memory_space<vmem>>, vector<1x256xf32>
    %12 = vector.broadcast %11 : vector<1x256xf32> to vector<8x256xf32>
    %13 = arith.addf %10, %12 : vector<8x256xf32>
    %cst_11 = arith.constant 0.000000e+00 : f32
    %14 = vector.broadcast %cst_11 : f32 to vector<8x256xf32>
    %15 = arith.maximumf %13, %14 : vector<8x256xf32>
    %16 = arith.truncf %15 : vector<8x256xf32> to vector<8x256xbf16>
    %c0_12 = arith.constant 0 : index
    %c0_13 = arith.constant 0 : index
    %17 = vector.load %arg6[%c0_12, %c0_13] : memref<256x128xbf16, #tpu.memory_space<vmem>>, vector<256x128xbf16>
    %cst_14 = arith.constant dense<0.000000e+00> : vector<8x128xf32>
    %18 = tpu.matmul %16, %17, %cst_14 {dimension_numbers = #tpu.dot_dimension_numbers<[1], [0], [0], [1], [0, 0, 1, 1], [], []>} : vector<8x256xbf16>, vector<256x128xbf16>, vector<8x128xf32> -> vector<8x128xf32>
    %c0_15 = arith.constant 0 : index
    %c0_16 = arith.constant 0 : index
    %19 = vector.load %arg7[%c0_15, %c0_16] : memref<1x128xf32, #tpu.memory_space<vmem>>, vector<1x128xf32>
    %20 = vector.broadcast %19 : vector<1x128xf32> to vector<8x128xf32>
    %21 = arith.addf %18, %20 : vector<8x128xf32>
    %c0_17 = arith.constant 0 : index
    %c0_18 = arith.constant 0 : index
    %22 = vector.load %arg8[%c0_17, %c0_18] : memref<8x128xf32, #tpu.memory_space<vmem>>, vector<8x128xf32>
    tpu.vector_store %arg8[%c0_17, %c0_18], %21 {strides = array<i32>} : memref<8x128xf32, #tpu.memory_space<vmem>>, vector<8x128xf32>,
    return
  }
  func.func @transform_0(%arg0: i32) -> (i32, i32) {
    %c0_i32 = arith.constant 0 : i32
    %c0_i32_0 = arith.constant 0 : i32
    return %arg0, %c0_i32 : i32, i32
  }
  func.func @transform_1(%arg0: i32) -> (i32, i32) {
    %c0_i32 = arith.constant 0 : i32
    %c0_i32_0 = arith.constant 0 : i32
    %c0_i32_1 = arith.constant 0 : i32
    return %c0_i32, %c0_i32_0 : i32, i32
  }
  func.func @transform_2(%arg0: i32) -> (i32, i32) {
    %c0_i32 = arith.constant 0 : i32
    %c0_i32_0 = arith.constant 0 : i32
    %c0_i32_1 = arith.constant 0 : i32
    return %c0_i32, %c0_i32_0 : i32, i32
  }
  func.func @transform_3(%arg0: i32) -> (i32, i32) {
    %c0_i32 = arith.constant 0 : i32
    %c0_i32_0 = arith.constant 0 : i32
    %c0_i32_1 = arith.constant 0 : i32
    return %c0_i32, %c0_i32_0 : i32, i32
  }
  func.func @transform_4(%arg0: i32) -> (i32, i32) {
    %c0_i32 = arith.constant 0 : i32
    %c0_i32_0 = arith.constant 0 : i32
    %c0_i32_1 = arith.constant 0 : i32
    return %c0_i32, %c0_i32_0 : i32, i32
  }
  func.func @transform_5(%arg0: i32) -> (i32, i32) {
    %c0_i32 = arith.constant 0 : i32
    %c0_i32_0 = arith.constant 0 : i32
    %c0_i32_1 = arith.constant 0 : i32
    return %c0_i32, %c0_i32_0 : i32, i32
  }
  func.func @transform_6(%arg0: i32) -> (i32, i32) {
    %c0_i32 = arith.constant 0 : i32
    %c0_i32_0 = arith.constant 0 : i32
    %c0_i32_1 = arith.constant 0 : i32
    return %c0_i32, %c0_i32_0 : i32, i32
  }
  func.func @transform_7(%arg0: i32) -> (i32, i32) {
    %c0_i32 = arith.constant 0 : i32
    %c0_i32_0 = arith.constant 0 : i32
    return %arg0, %c0_i32 : i32, i32
  }
}

</mosaic_0001>

<llo_original>
// kernel: cnn_forward.1
$region0: #{cnn_forward.1}
  #allocation0 [shape = 'u32[]', space=smem, size = 0x4, offset = 0x4, fixed_abs, tag = 'smem constant byte address 0x4 - core index']
  #allocation1 [shape = 'u32[144,128]{1,0:T(1,128)}', space=vmem, size = 0x12000, scoped, tag = 'internal scratch']
  %s0 = inlined_call_operand.vmem [shape: bf16[8,490], index: 0, kind: input, shape index: {}]
  %s1 = inlined_call_operand.hbm [shape: bf16[490,896], index: 1, kind: input, shape index: {}]
  %s2 = inlined_call_operand.vmem [shape: f32[1,896], index: 2, kind: input, shape index: {}]
  %s3 = inlined_call_operand.hbm [shape: bf16[896,256], index: 3, kind: input, shape index: {}]
  %s4 = inlined_call_operand.vmem [shape: f32[1,256], index: 4, kind: input, shape index: {}]
  %s5 = inlined_call_operand.vmem [shape: bf16[256,128], index: 5, kind: input, shape index: {}]
  %s6 = inlined_call_operand.vmem [shape: f32[1,128], index: 6, kind: input, shape index: {}]
  %s7 = inlined_call_operand.vmem [shape: f32[8,128], index: 7, kind: output, shape index: {}]
  %s8 = sld [smem:[#allocation0]]
  $region46: #{cnn_forward.1} parent=0
    _
  %s10 = ssub.s32 1, %s8
  %s11 = scalar_select 0, %s10, %s8
  $region1: #{cnn_forward.1} parent=0
    #allocation2 [shape = 'u8[888832]{0}', space=vmem, size = 0xd9000, scoped, tag = 'input window, operand 1, single buffered']
    #allocation3 [shape = 's32[1]{0}', space=sflag, size = 0x4, scoped, tag = 'scoped memory for cnn_forward.1']
    #allocation4 [shape = 'u8[458752]{0}', space=vmem, size = 0x70000, scoped, tag = 'input window, operand 3, single buffered']
    #allocation5 [shape = 's32[1]{0}', space=sflag, size = 0x4, scoped, tag = 'scoped memory for cnn_forward.1']
    %12 = vsyncpa [#allocation3], 0
    %13 = vsyncpa [#allocation5], 0
    // Predicated region
    $region2: #{cnn_forward.1} parent=1 // pred_check
      _
    $region3: #{cnn_forward.1} parent=1 // pred_check_branch
      %15 = sbr.rel (0) target = $region5
    $region4: #{cnn_forward.1} parent=1 // pred_region
      _
    $region5: #{cnn_forward.1} parent=1 // pred_fallthru
      _
    // Predicated region
    $region6: #{cnn_forward.1} parent=1 // pred_check
      _
    $region7: #{cnn_forward.1} parent=1 // pred_check_branch
      %17 = sbr.rel (0) target = $region9
    $region8: #{cnn_forward.1} parent=1 // pred_region
      %s19 = ssub.s32 27776, 27776
      %20 = vsyncadd [#allocation3], %s19
      %s21 = sshll.u32 [#allocation2], 4
      %s22 = int_to_ptr.vmem [resolvable:$true] %s21
      %27 = dma.hbm_to_vmem [thread:$0]  %s1, 27776, %s22, [#allocation3], 448, 448, 28
    $region9: #{cnn_forward.1} parent=1 // pred_fallthru
      _
    // Predicated region
    $region10: #{cnn_forward.1} parent=1 // pred_check
      _
    $region11: #{cnn_forward.1} parent=1 // pred_check_branch
      %29 = sbr.rel (0) target = $region13
    $region12: #{cnn_forward.1} parent=1 // pred_region
      _
    $region13: #{cnn_forward.1} parent=1 // pred_fallthru
      _
    // Predicated region
    $region14: #{cnn_forward.1} parent=1 // pred_check
      _
    $region15: #{cnn_forward.1} parent=1 // pred_check_branch
      %31 = sbr.rel (0) target = $region17
    $region16: #{cnn_forward.1} parent=1 // pred_region
      %s33 = ssub.s32 14336, 14336
      %34 = vsyncadd [#allocation5], %s33
      %s35 = sshll.u32 [#allocation4], 4
      %s36 = int_to_ptr.vmem [resolvable:$true] %s35
      %41 = dma.hbm_to_vmem [thread:$0]  %s3, 14336, %s36, [#allocation5], 128, 128, 8
    $region17: #{cnn_forward.1} parent=1 // pred_fallthru
      _
    // Predicated region
    $region18: #{cnn_forward.1} parent=1 // pred_check
      _
    $region19: #{cnn_forward.1} parent=1 // pred_check_branch
      %43 = sbr.rel (0) target = $region21
    $region20: #{cnn_forward.1} parent=1 // pred_region
      _
    $region21: #{cnn_forward.1} parent=1 // pred_fallthru
      _
    // Predicated region
    $region22: #{cnn_forward.1} parent=1 // pred_check
      _
    $region23: #{cnn_forward.1} parent=1 // pred_check_branch
      %45 = sbr.rel (0) target = $region25
    $region24: #{cnn_forward.1} parent=1 // pred_region
      _
    $region25: #{cnn_forward.1} parent=1 // pred_fallthru
      _
    // Predicated region
    $region26: #{cnn_forward.1} parent=1 // pred_check
      _
    $region27: #{cnn_forward.1} parent=1 // pred_check_branch
      %47 = sbr.rel (0) target = $region29
    $region28: #{cnn_forward.1} parent=1 // pred_region
      _
    $region29: #{cnn_forward.1} parent=1 // pred_fallthru
      _
    // Predicated region
    $region30: #{cnn_forward.1} parent=1 // pred_check
      _
    $region31: #{cnn_forward.1} parent=1 // pred_check_branch
      %49 = sbr.rel (0) target = $region33
    $region32: #{cnn_forward.1} parent=1 // pred_region
      %50 = dma.done [#allocation3], 27776
    $region33: #{cnn_forward.1} parent=1 // pred_fallthru
      _
    // Predicated region
    $region34: #{cnn_forward.1} parent=1 // pred_check
      _
    $region35: #{cnn_forward.1} parent=1 // pred_check_branch
      %52 = sbr.rel (0) target = $region37
    $region36: #{cnn_forward.1} parent=1 // pred_region
      %53 = dma.done [#allocation5], 14336
    $region37: #{cnn_forward.1} parent=1 // pred_fallthru
      _
    %v55 = vld [vmem:[%s0] sm:$0xff]
    %v56 = vld [vmem:[%s0 + $0x8] sm:$0xff]
    %v57 = vld [vmem:[#allocation2] sm:$0xff]
    %v58 = vld [vmem:[#allocation2 + $0x8] sm:$0xff]
    %v59 = vld [vmem:[#allocation2 + $0x10] sm:$0xff]
    %v60 = vld [vmem:[#allocation2 + $0x18] sm:$0xf]
    %v61 = vld [vmem:[#allocation2 + $0x1c] sm:$0xff]
    %v62 = vld [vmem:[#allocation2 + $0x24] sm:$0xff]
    %v63 = vld [vmem:[#allocation2 + $0x2c] sm:$0xff]
    %v64 = vld [vmem:[#allocation2 + $0x34] sm:$0xf]
    %v65 = vld [vmem:[#allocation2 + $0x38] sm:$0xff]
    %v66 = vld [vmem:[#allocation2 + $0x40] sm:$0xff]
    %v67 = vld [vmem:[#allocation2 + $0x48] sm:$0xff]
    %v68 = vld [vmem:[#allocation2 + $0x50] sm:$0xf]
    %v69 = vld [vmem:[#allocation2 + $0x54] sm:$0xff]
    %v70 = vld [vmem:[#allocation2 + $0x5c] sm:$0xff]
    %v71 = vld [vmem:[#allocation2 + $0x64] sm:$0xff]
    %v72 = vld [vmem:[#allocation2 + $0x6c] sm:$0xf]
    %v73 = vld [vmem:[#allocation2 + $0x70] sm:$0xff]
    %v74 = vld [vmem:[#allocation2 + $0x78] sm:$0xff]
    %v75 = vld [vmem:[#allocation2 + $0x80] sm:$0xff]
    %v76 = vld [vmem:[#allocation2 + $0x88] sm:$0xf]
    %v77 = vld [vmem:[#allocation2 + $0x8c] sm:$0xff]
    %v78 = vld [vmem:[#allocation2 + $0x94] sm:$0xff]
    %v79 = vld [vmem:[#allocation2 + $0x9c] sm:$0xff]
    %v80 = vld [vmem:[#allocation2 + $0xa4] sm:$0xf]
    %v81 = vld [vmem:[#allocation2 + $0xa8] sm:$0xff]
    %v82 = vld [vmem:[#allocation2 + $0xb0] sm:$0xff]
    %v83 = vld [vmem:[#allocation2 + $0xb8] sm:$0xff]
    %v84 = vld [vmem:[#allocation2 + $0xc0] sm:$0xf]
    %v85 = vld [vmem:[#allocation2 + $0xc4] sm:$0xff]
    %v86 = vld [vmem:[#allocation2 + $0xcc] sm:$0xff]
    %v87 = vld [vmem:[#allocation2 + $0xd4] sm:$0xff]
    %v88 = vld [vmem:[#allocation2 + $0xdc] sm:$0xf]
    %v89 = vld [vmem:[#allocation2 + $0xe0] sm:$0xff]
    %v90 = vld [vmem:[#allocation2 + $0xe8] sm:$0xff]
    %v91 = vld [vmem:[#allocation2 + $0xf0] sm:$0xff]
    %v92 = vld [vmem:[#allocation2 + $0xf8] sm:$0xf]
    %v93 = vld [vmem:[#allocation2 + $0xfc] sm:$0xff]
    %v94 = vld [vmem:[#allocation2 + $0x104] sm:$0xff]
    %v95 = vld [vmem:[#allocation2 + $0x10c] sm:$0xff]
    %v96 = vld [vmem:[#allocation2 + $0x114] sm:$0xf]
    %v97 = vld [vmem:[#allocation2 + $0x118] sm:$0xff]
    %v98 = vld [vmem:[#allocation2 + $0x120] sm:$0xff]
    %v99 = vld [vmem:[#allocation2 + $0x128] sm:$0xff]
    %v100 = vld [vmem:[#allocation2 + $0x130] sm:$0xf]
    %v101 = vld [vmem:[#allocation2 + $0x134] sm:$0xff]
    %v102 = vld [vmem:[#allocation2 + $0x13c] sm:$0xff]
    %v103 = vld [vmem:[#allocation2 + $0x144] sm:$0xff]
    %v104 = vld [vmem:[#allocation2 + $0x14c] sm:$0xf]
    %v105 = vld [vmem:[#allocation2 + $0x150] sm:$0xff]
    %v106 = vld [vmem:[#allocation2 + $0x158] sm:$0xff]
    %v107 = vld [vmem:[#allocation2 + $0x160] sm:$0xff]
    %v108 = vld [vmem:[#allocation2 + $0x168] sm:$0xf]
    %v109 = vld [vmem:[#allocation2 + $0x16c] sm:$0xff]
    %v110 = vld [vmem:[#allocation2 + $0x174] sm:$0xff]
    %v111 = vld [vmem:[#allocation2 + $0x17c] sm:$0xff]
    %v112 = vld [vmem:[#allocation2 + $0x184] sm:$0xf]
    %v113 = vld [vmem:[#allocation2 + $0x188] sm:$0xff]
    %v114 = vld [vmem:[#allocation2 + $0x190] sm:$0xff]
    %v115 = vld [vmem:[#allocation2 + $0x198] sm:$0xff]
    %v116 = vld [vmem:[#allocation2 + $0x1a0] sm:$0xf]
    %v117 = vld [vmem:[#allocation2 + $0x1a4] sm:$0xff]
    %v118 = vld [vmem:[#allocation2 + $0x1ac] sm:$0xff]
    %v119 = vld [vmem:[#allocation2 + $0x1b4] sm:$0xff]
    %v120 = vld [vmem:[#allocation2 + $0x1bc] sm:$0xf]
    %v121 = vld [vmem:[#allocation2 + $0x1c0] sm:$0xff]
    %v122 = vld [vmem:[#allocation2 + $0x1c8] sm:$0xff]
    %v123 = vld [vmem:[#allocation2 + $0x1d0] sm:$0xff]
    %v124 = vld [vmem:[#allocation2 + $0x1d8] sm:$0xf]
    %v125 = vld [vmem:[#allocation2 + $0x1dc] sm:$0xff]
    %v126 = vld [vmem:[#allocation2 + $0x1e4] sm:$0xff]
    %v127 = vld [vmem:[#allocation2 + $0x1ec] sm:$0xff]
    %v128 = vld [vmem:[#allocation2 + $0x1f4] sm:$0xf]
    %v129 = vld [vmem:[#allocation2 + $0x1f8] sm:$0xff]
    %v130 = vld [vmem:[#allocation2 + $0x200] sm:$0xff]
    %v131 = vld [vmem:[#allocation2 + $0x208] sm:$0xff]
    %v132 = vld [vmem:[#allocation2 + $0x210] sm:$0xf]
    %v133 = vld [vmem:[#allocation2 + $0x214] sm:$0xff]
    %v134 = vld [vmem:[#allocation2 + $0x21c] sm:$0xff]
    %v135 = vld [vmem:[#allocation2 + $0x224] sm:$0xff]
    %v136 = vld [vmem:[#allocation2 + $0x22c] sm:$0xf]
    %v137 = vld [vmem:[#allocation2 + $0x230] sm:$0xff]
    %v138 = vld [vmem:[#allocation2 + $0x238] sm:$0xff]
    %v139 = vld [vmem:[#allocation2 + $0x240] sm:$0xff]
    %v140 = vld [vmem:[#allocation2 + $0x248] sm:$0xf]
    %v141 = vld [vmem:[#allocation2 + $0x24c] sm:$0xff]
    %v142 = vld [vmem:[#allocation2 + $0x254] sm:$0xff]
    %v143 = vld [vmem:[#allocation2 + $0x25c] sm:$0xff]
    %v144 = vld [vmem:[#allocation2 + $0x264] sm:$0xf]
    %v145 = vld [vmem:[#allocation2 + $0x268] sm:$0xff]
    %v146 = vld [vmem:[#allocation2 + $0x270] sm:$0xff]
    %v147 = vld [vmem:[#allocation2 + $0x278] sm:$0xff]
    %v148 = vld [vmem:[#allocation2 + $0x280] sm:$0xf]
    %v149 = vld [vmem:[#allocation2 + $0x284] sm:$0xff]
    %v150 = vld [vmem:[#allocation2 + $0x28c] sm:$0xff]
    %v151 = vld [vmem:[#allocation2 + $0x294] sm:$0xff]
    %v152 = vld [vmem:[#allocation2 + $0x29c] sm:$0xf]
    %v153 = vld [vmem:[#allocation2 + $0x2a0] sm:$0xff]
    %v154 = vld [vmem:[#allocation2 + $0x2a8] sm:$0xff]
    %v155 = vld [vmem:[#allocation2 + $0x2b0] sm:$0xff]
    %v156 = vld [vmem:[#allocation2 + $0x2b8] sm:$0xf]
    %v157 = vld [vmem:[#allocation2 + $0x2bc] sm:$0xff]
    %v158 = vld [vmem:[#allocation2 + $0x2c4] sm:$0xff]
    %v159 = vld [vmem:[#allocation2 + $0x2cc] sm:$0xff]
    %v160 = vld [vmem:[#allocation2 + $0x2d4] sm:$0xf]
    %v161 = vld [vmem:[#allocation2 + $0x2d8] sm:$0xff]
    %v162 = vld [vmem:[#allocation2 + $0x2e0] sm:$0xff]
    %v163 = vld [vmem:[#allocation2 + $0x2e8] sm:$0xff]
    %v164 = vld [vmem:[#allocation2 + $0x2f0] sm:$0xf]
    %v165 = vld [vmem:[#allocation2 + $0x2f4] sm:$0xff]
    %v166 = vld [vmem:[#allocation2 + $0x2fc] sm:$0xff]
    %v167 = vld [vmem:[#allocation2 + $0x304] sm:$0xff]
    %v168 = vld [vmem:[#allocation2 + $0x30c] sm:$0xf]
    %v169 = vld [vmem:[#allocation2 + $0x310] sm:$0xff]
    %v170 = vld [vmem:[#allocation2 + $0x318] sm:$0xff]
    %v171 = vld [vmem:[#allocation2 + $0x320] sm:$0xff]
    %v172 = vld [vmem:[#allocation2 + $0x328] sm:$0xf]
    %v173 = vld [vmem:[#allocation2 + $0x32c] sm:$0xff]
    %v174 = vld [vmem:[#allocation2 + $0x334] sm:$0xff]
    %v175 = vld [vmem:[#allocation2 + $0x33c] sm:$0xff]
    %v176 = vld [vmem:[#allocation2 + $0x344] sm:$0xf]
    %v177 = vld [vmem:[#allocation2 + $0x348] sm:$0xff]
    %v178 = vld [vmem:[#allocation2 + $0x350] sm:$0xff]
    %v179 = vld [vmem:[#allocation2 + $0x358] sm:$0xff]
    %v180 = vld [vmem:[#allocation2 + $0x360] sm:$0xf]
    %v181 = vld [vmem:[#allocation2 + $0x364] sm:$0xff]
    %v182 = vld [vmem:[#allocation2 + $0x36c] sm:$0xff]
    %v183 = vld [vmem:[#allocation2 + $0x374] sm:$0xff]
    %v184 = vld [vmem:[#allocation2 + $0x37c] sm:$0xf]
    %v185 = vld [vmem:[#allocation2 + $0x380] sm:$0xff]
    %v186 = vld [vmem:[#allocation2 + $0x388] sm:$0xff]
    %v187 = vld [vmem:[#allocation2 + $0x390] sm:$0xff]
    %v188 = vld [vmem:[#allocation2 + $0x398] sm:$0xf]
    %v189 = vld [vmem:[#allocation2 + $0x39c] sm:$0xff]
    %v190 = vld [vmem:[#allocation2 + $0x3a4] sm:$0xff]
    %v191 = vld [vmem:[#allocation2 + $0x3ac] sm:$0xff]
    %v192 = vld [vmem:[#allocation2 + $0x3b4] sm:$0xf]
    %v193 = vld [vmem:[#allocation2 + $0x3b8] sm:$0xff]
    %v194 = vld [vmem:[#allocation2 + $0x3c0] sm:$0xff]
    %v195 = vld [vmem:[#allocation2 + $0x3c8] sm:$0xff]
    %v196 = vld [vmem:[#allocation2 + $0x3d0] sm:$0xf]
    %v197 = vld [vmem:[#allocation2 + $0x3d4] sm:$0xff]
    %v198 = vld [vmem:[#allocation2 + $0x3dc] sm:$0xff]
    %v199 = vld [vmem:[#allocation2 + $0x3e4] sm:$0xff]
    %v200 = vld [vmem:[#allocation2 + $0x3ec] sm:$0xf]
    %v201 = vld [vmem:[#allocation2 + $0x3f0] sm:$0xff]
    %v202 = vld [vmem:[#allocation2 + $0x3f8] sm:$0xff]
    %v203 = vld [vmem:[#allocation2 + $0x400] sm:$0xff]
    %v204 = vld [vmem:[#allocation2 + $0x408] sm:$0xf]
    %v205 = vld [vmem:[#allocation2 + $0x40c] sm:$0xff]
    %v206 = vld [vmem:[#allocation2 + $0x414] sm:$0xff]
    %v207 = vld [vmem:[#allocation2 + $0x41c] sm:$0xff]
    %v208 = vld [vmem:[#allocation2 + $0x424] sm:$0xf]
    %v209 = vld [vmem:[#allocation2 + $0x428] sm:$0xff]
    %v210 = vld [vmem:[#allocation2 + $0x430] sm:$0xff]
    %v211 = vld [vmem:[#allocation2 + $0x438] sm:$0xff]
    %v212 = vld [vmem:[#allocation2 + $0x440] sm:$0xf]
    %v213 = vld [vmem:[#allocation2 + $0x444] sm:$0xff]
    %v214 = vld [vmem:[#allocation2 + $0x44c] sm:$0xff]
    %v215 = vld [vmem:[#allocation2 + $0x454] sm:$0xff]
    %v216 = vld [vmem:[#allocation2 + $0x45c] sm:$0xf]
    %v217 = vld [vmem:[#allocation2 + $0x460] sm:$0xff]
    %v218 = vld [vmem:[#allocation2 + $0x468] sm:$0xff]
    %v219 = vld [vmem:[#allocation2 + $0x470] sm:$0xff]
    %v220 = vld [vmem:[#allocation2 + $0x478] sm:$0xf]
    %v221 = vld [vmem:[#allocation2 + $0x47c] sm:$0xff]
    %v222 = vld [vmem:[#allocation2 + $0x484] sm:$0xff]
    %v223 = vld [vmem:[#allocation2 + $0x48c] sm:$0xff]
    %v224 = vld [vmem:[#allocation2 + $0x494] sm:$0xf]
    %v225 = vld [vmem:[#allocation2 + $0x498] sm:$0xff]
    %v226 = vld [vmem:[#allocation2 + $0x4a0] sm:$0xff]
    %v227 = vld [vmem:[#allocation2 + $0x4a8] sm:$0xff]
    %v228 = vld [vmem:[#allocation2 + $0x4b0] sm:$0xf]
    %v229 = vld [vmem:[#allocation2 + $0x4b4] sm:$0xff]
    %v230 = vld [vmem:[#allocation2 + $0x4bc] sm:$0xff]
    %v231 = vld [vmem:[#allocation2 + $0x4c4] sm:$0xff]
    %v232 = vld [vmem:[#allocation2 + $0x4cc] sm:$0xf]
    %v233 = vld [vmem:[#allocation2 + $0x4d0] sm:$0xff]
    %v234 = vld [vmem:[#allocation2 + $0x4d8] sm:$0xff]
    %v235 = vld [vmem:[#allocation2 + $0x4e0] sm:$0xff]
    %v236 = vld [vmem:[#allocation2 + $0x4e8] sm:$0xf]
    %v237 = vld [vmem:[#allocation2 + $0x4ec] sm:$0xff]
    %v238 = vld [vmem:[#allocation2 + $0x4f4] sm:$0xff]
    %v239 = vld [vmem:[#allocation2 + $0x4fc] sm:$0xff]
    %v240 = vld [vmem:[#allocation2 + $0x504] sm:$0xf]
    %v241 = vld [vmem:[#allocation2 + $0x508] sm:$0xff]
    %v242 = vld [vmem:[#allocation2 + $0x510] sm:$0xff]
    %v243 = vld [vmem:[#allocation2 + $0x518] sm:$0xff]
    %v244 = vld [vmem:[#allocation2 + $0x520] sm:$0xf]
    %v245 = vld [vmem:[#allocation2 + $0x524] sm:$0xff]
    %v246 = vld [vmem:[#allocation2 + $0x52c] sm:$0xff]
    %v247 = vld [vmem:[#allocation2 + $0x534] sm:$0xff]
    %v248 = vld [vmem:[#allocation2 + $0x53c] sm:$0xf]
    %v249 = vld [vmem:[#allocation2 + $0x540] sm:$0xff]
    %v250 = vld [vmem:[#allocation2 + $0x548] sm:$0xff]
    %v251 = vld [vmem:[#allocation2 + $0x550] sm:$0xff]
    %v252 = vld [vmem:[#allocation2 + $0x558] sm:$0xf]
    %v253 = vld [vmem:[#allocation2 + $0x55c] sm:$0xff]
    %v254 = vld [vmem:[#allocation2 + $0x564] sm:$0xff]
    %v255 = vld [vmem:[#allocation2 + $0x56c] sm:$0xff]
    %v256 = vld [vmem:[#allocation2 + $0x574] sm:$0xf]
    %v257 = vld [vmem:[#allocation2 + $0x578] sm:$0xff]
    %v258 = vld [vmem:[#allocation2 + $0x580] sm:$0xff]
    %v259 = vld [vmem:[#allocation2 + $0x588] sm:$0xff]
    %v260 = vld [vmem:[#allocation2 + $0x590] sm:$0xf]
    %v261 = vld [vmem:[#allocation2 + $0x594] sm:$0xff]
    %v262 = vld [vmem:[#allocation2 + $0x59c] sm:$0xff]
    %v263 = vld [vmem:[#allocation2 + $0x5a4] sm:$0xff]
    %v264 = vld [vmem:[#allocation2 + $0x5ac] sm:$0xf]
    %v265 = vld [vmem:[#allocation2 + $0x5b0] sm:$0xff]
    %v266 = vld [vmem:[#allocation2 + $0x5b8] sm:$0xff]
    %v267 = vld [vmem:[#allocation2 + $0x5c0] sm:$0xff]
    %v268 = vld [vmem:[#allocation2 + $0x5c8] sm:$0xf]
    %v269 = vld [vmem:[#allocation2 + $0x5cc] sm:$0xff]
    %v270 = vld [vmem:[#allocation2 + $0x5d4] sm:$0xff]
    %v271 = vld [vmem:[#allocation2 + $0x5dc] sm:$0xff]
    %v272 = vld [vmem:[#allocation2 + $0x5e4] sm:$0xf]
    %v273 = vld [vmem:[#allocation2 + $0x5e8] sm:$0xff]
    %v274 = vld [vmem:[#allocation2 + $0x5f0] sm:$0xff]
    %v275 = vld [vmem:[#allocation2 + $0x5f8] sm:$0xff]
    %v276 = vld [vmem:[#allocation2 + $0x600] sm:$0xf]
    %v277 = vld [vmem:[#allocation2 + $0x604] sm:$0xff]
    %v278 = vld [vmem:[#allocation2 + $0x60c] sm:$0xff]
    %v279 = vld [vmem:[#allocation2 + $0x614] sm:$0xff]
    %v280 = vld [vmem:[#allocation2 + $0x61c] sm:$0xf]
    %v281 = vld [vmem:[#allocation2 + $0x620] sm:$0xff]
    %v282 = vld [vmem:[#allocation2 + $0x628] sm:$0xff]
    %v283 = vld [vmem:[#allocation2 + $0x630] sm:$0xff]
    %v284 = vld [vmem:[#allocation2 + $0x638] sm:$0xf]
    %v285 = vld [vmem:[#allocation2 + $0x63c] sm:$0xff]
    %v286 = vld [vmem:[#allocation2 + $0x644] sm:$0xff]
    %v287 = vld [vmem:[#allocation2 + $0x64c] sm:$0xff]
    %v288 = vld [vmem:[#allocation2 + $0x654] sm:$0xf]
    %v289 = vld [vmem:[#allocation2 + $0x658] sm:$0xff]
    %v290 = vld [vmem:[#allocation2 + $0x660] sm:$0xff]
    %v291 = vld [vmem:[#allocation2 + $0x668] sm:$0xff]
    %v292 = vld [vmem:[#allocation2 + $0x670] sm:$0xf]
    %v293 = vld [vmem:[#allocation2 + $0x674] sm:$0xff]
    %v294 = vld [vmem:[#allocation2 + $0x67c] sm:$0xff]
    %v295 = vld [vmem:[#allocation2 + $0x684] sm:$0xff]
    %v296 = vld [vmem:[#allocation2 + $0x68c] sm:$0xf]
    %v297 = vld [vmem:[#allocation2 + $0x690] sm:$0xff]
    %v298 = vld [vmem:[#allocation2 + $0x698] sm:$0xff]
    %v299 = vld [vmem:[#allocation2 + $0x6a0] sm:$0xff]
    %v300 = vld [vmem:[#allocation2 + $0x6a8] sm:$0xf]
    %v301 = vld [vmem:[#allocation2 + $0x6ac] sm:$0x11]
    %v302 = vld [vmem:[#allocation2 + $0x6b4] sm:$0x11]
    %v303 = vld [vmem:[#allocation2 + $0x6bc] sm:$0x11]
    %v304 = vld [vmem:[#allocation2 + $0x6c4] sm:$0x1]
    %v305 = vld [vmem:[%s2] sm:$0xff]
    %v307 = vlaneseq
    %v308 = vshrl.u32 %v307, 7
    %v309 = vsub.s32 0, %v308
    %v310 = vrot.slane %v305, %v309
    %v311 = vlaneseq
    %v312 = vshrl.u32 %v311, 7
    %v313 = vsub.s32 1, %v312
    %v314 = vrot.slane %v305, %v313
    %v315 = vlaneseq
    %v316 = vshrl.u32 %v315, 7
    %v317 = vsub.s32 2, %v316
    %v318 = vrot.slane %v305, %v317
    %v319 = vlaneseq
    %v320 = vshrl.u32 %v319, 7
    %v321 = vsub.s32 3, %v320
    %v322 = vrot.slane %v305, %v321
    %v323 = vlaneseq
    %v324 = vshrl.u32 %v323, 7
    %v325 = vsub.s32 4, %v324
    %v326 = vrot.slane %v305, %v325
    %v327 = vlaneseq
    %v328 = vshrl.u32 %v327, 7
    %v329 = vsub.s32 5, %v328
    %v330 = vrot.slane %v305, %v329
    %v331 = vlaneseq
    %v332 = vshrl.u32 %v331, 7
    %v333 = vsub.s32 6, %v332
    %v334 = vrot.slane %v305, %v333
    %v344 = vunpack.c.l.b16 %v55
    %v345 = vunpack.c.h.b16 %v55
    %v346 = vunpack.c.l.b16 %v56
    %v347 = vunpack.c.h.b16 %v56
    %v348 = vpack.c.b16 %v344, %v344
    %v349 = vpack.c.b16 %v345, %v345
    %v350 = vpack.c.b16 %v346, %v346
    %v351 = vpack.c.b16 %v347, %v347
    %v603 = vunpack.c.l.b16 %v57
    %v604 = vunpack.c.h.b16 %v57
    %v605 = vunpack.c.l.b16 %v58
    %v606 = vunpack.c.h.b16 %v58
    %v607 = vunpack.c.l.b16 %v59
    %v608 = vunpack.c.h.b16 %v59
    %v609 = vunpack.c.l.b16 %v60
    %v610 = vunpack.c.l.b16 %v61
    %v611 = vunpack.c.h.b16 %v61
    %v612 = vunpack.c.l.b16 %v62
    %v613 = vunpack.c.h.b16 %v62
    %v614 = vunpack.c.l.b16 %v63
    %v615 = vunpack.c.h.b16 %v63
    %v616 = vunpack.c.l.b16 %v64
    %v617 = vunpack.c.l.b16 %v65
    %v618 = vunpack.c.h.b16 %v65
    %v619 = vunpack.c.l.b16 %v66
    %v620 = vunpack.c.h.b16 %v66
    %v621 = vunpack.c.l.b16 %v67
    %v622 = vunpack.c.h.b16 %v67
    %v623 = vunpack.c.l.b16 %v68
    %v624 = vunpack.c.l.b16 %v69
    %v625 = vunpack.c.h.b16 %v69
    %v626 = vunpack.c.l.b16 %v70
    %v627 = vunpack.c.h.b16 %v70
    %v628 = vunpack.c.l.b16 %v71
    %v629 = vunpack.c.h.b16 %v71
    %v630 = vunpack.c.l.b16 %v72
    %v631 = vunpack.c.l.b16 %v73
    %v632 = vunpack.c.h.b16 %v73
    %v633 = vunpack.c.l.b16 %v74
    %v634 = vunpack.c.h.b16 %v74
    %v635 = vunpack.c.l.b16 %v75
    %v636 = vunpack.c.h.b16 %v75
    %v637 = vunpack.c.l.b16 %v76
    %v638 = vunpack.c.l.b16 %v77
    %v639 = vunpack.c.h.b16 %v77
    %v640 = vunpack.c.l.b16 %v78
    %v641 = vunpack.c.h.b16 %v78
    %v642 = vunpack.c.l.b16 %v79
    %v643 = vunpack.c.h.b16 %v79
    %v644 = vunpack.c.l.b16 %v80
    %v645 = vunpack.c.l.b16 %v81
    %v646 = vunpack.c.h.b16 %v81
    %v647 = vunpack.c.l.b16 %v82
    %v648 = vunpack.c.h.b16 %v82
    %v649 = vunpack.c.l.b16 %v83
    %v650 = vunpack.c.h.b16 %v83
    %v651 = vunpack.c.l.b16 %v84
    %v652 = vunpack.c.l.b16 %v85
    %v653 = vunpack.c.h.b16 %v85
    %v654 = vunpack.c.l.b16 %v86
    %v655 = vunpack.c.h.b16 %v86
    %v656 = vunpack.c.l.b16 %v87
    %v657 = vunpack.c.h.b16 %v87
    %v658 = vunpack.c.l.b16 %v88
    %v659 = vunpack.c.l.b16 %v89
    %v660 = vunpack.c.h.b16 %v89
    %v661 = vunpack.c.l.b16 %v90
    %v662 = vunpack.c.h.b16 %v90
    %v663 = vunpack.c.l.b16 %v91
    %v664 = vunpack.c.h.b16 %v91
    %v665 = vunpack.c.l.b16 %v92
    %v666 = vunpack.c.l.b16 %v93
    %v667 = vunpack.c.h.b16 %v93
    %v668 = vunpack.c.l.b16 %v94
    %v669 = vunpack.c.h.b16 %v94
    %v670 = vunpack.c.l.b16 %v95
    %v671 = vunpack.c.h.b16 %v95
    %v672 = vunpack.c.l.b16 %v96
    %v673 = vunpack.c.l.b16 %v97
    %v674 = vunpack.c.h.b16 %v97
    %v675 = vunpack.c.l.b16 %v98
    %v676 = vunpack.c.h.b16 %v98
    %v677 = vunpack.c.l.b16 %v99
    %v678 = vunpack.c.h.b16 %v99
    %v679 = vunpack.c.l.b16 %v100
    %v680 = vunpack.c.l.b16 %v101
    %v681 = vunpack.c.h.b16 %v101
    %v682 = vunpack.c.l.b16 %v102
    %v683 = vunpack.c.h.b16 %v102
    %v684 = vunpack.c.l.b16 %v103
    %v685 = vunpack.c.h.b16 %v103
    %v686 = vunpack.c.l.b16 %v104
    %v687 = vunpack.c.l.b16 %v105
    %v688 = vunpack.c.h.b16 %v105
    %v689 = vunpack.c.l.b16 %v106
    %v690 = vunpack.c.h.b16 %v106
    %v691 = vunpack.c.l.b16 %v107
    %v692 = vunpack.c.h.b16 %v107
    %v693 = vunpack.c.l.b16 %v108
    %v694 = vunpack.c.l.b16 %v109
    %v695 = vunpack.c.h.b16 %v109
    %v696 = vunpack.c.l.b16 %v110
    %v697 = vunpack.c.h.b16 %v110
    %v698 = vunpack.c.l.b16 %v111
    %v699 = vunpack.c.h.b16 %v111
    %v700 = vunpack.c.l.b16 %v112
    %v701 = vunpack.c.l.b16 %v113
    %v702 = vunpack.c.h.b16 %v113
    %v703 = vunpack.c.l.b16 %v114
    %v704 = vunpack.c.h.b16 %v114
    %v705 = vunpack.c.l.b16 %v115
    %v706 = vunpack.c.h.b16 %v115
    %v707 = vunpack.c.l.b16 %v116
    %v708 = vunpack.c.l.b16 %v117
    %v709 = vunpack.c.h.b16 %v117
    %v710 = vunpack.c.l.b16 %v118
    %v711 = vunpack.c.h.b16 %v118
    %v712 = vunpack.c.l.b16 %v119
    %v713 = vunpack.c.h.b16 %v119
    %v714 = vunpack.c.l.b16 %v120
    %v715 = vunpack.c.l.b16 %v121
    %v716 = vunpack.c.h.b16 %v121
    %v717 = vunpack.c.l.b16 %v122
    %v718 = vunpack.c.h.b16 %v122
    %v719 = vunpack.c.l.b16 %v123
    %v720 = vunpack.c.h.b16 %v123
    %v721 = vunpack.c.l.b16 %v124
    %v722 = vunpack.c.l.b16 %v125
    %v723 = vunpack.c.h.b16 %v125
    %v724 = vunpack.c.l.b16 %v126
    %v725 = vunpack.c.h.b16 %v126
    %v726 = vunpack.c.l.b16 %v127
    %v727 = vunpack.c.h.b16 %v127
    %v728 = vunpack.c.l.b16 %v128
    %v729 = vunpack.c.l.b16 %v129
    %v730 = vunpack.c.h.b16 %v129
    %v731 = vunpack.c.l.b16 %v130
    %v732 = vunpack.c.h.b16 %v130
    %v733 = vunpack.c.l.b16 %v131
    %v734 = vunpack.c.h.b16 %v131
    %v735 = vunpack.c.l.b16 %v132
    %v736 = vunpack.c.l.b16 %v133
    %v737 = vunpack.c.h.b16 %v133
    %v738 = vunpack.c.l.b16 %v134
    %v739 = vunpack.c.h.b16 %v134
    %v740 = vunpack.c.l.b16 %v135
    %v741 = vunpack.c.h.b16 %v135
    %v742 = vunpack.c.l.b16 %v136
    %v743 = vunpack.c.l.b16 %v137
    %v744 = vunpack.c.h.b16 %v137
    %v745 = vunpack.c.l.b16 %v138
    %v746 = vunpack.c.h.b16 %v138
    %v747 = vunpack.c.l.b16 %v139
    %v748 = vunpack.c.h.b16 %v139
    %v749 = vunpack.c.l.b16 %v140
    %v750 = vunpack.c.l.b16 %v141
    %v751 = vunpack.c.h.b16 %v141
    %v752 = vunpack.c.l.b16 %v142
    %v753 = vunpack.c.h.b16 %v142
    %v754 = vunpack.c.l.b16 %v143
    %v755 = vunpack.c.h.b16 %v143
    %v756 = vunpack.c.l.b16 %v144
    %v757 = vunpack.c.l.b16 %v145
    %v758 = vunpack.c.h.b16 %v145
    %v759 = vunpack.c.l.b16 %v146
    %v760 = vunpack.c.h.b16 %v146
    %v761 = vunpack.c.l.b16 %v147
    %v762 = vunpack.c.h.b16 %v147
    %v763 = vunpack.c.l.b16 %v148
    %v764 = vunpack.c.l.b16 %v149
    %v765 = vunpack.c.h.b16 %v149
    %v766 = vunpack.c.l.b16 %v150
    %v767 = vunpack.c.h.b16 %v150
    %v768 = vunpack.c.l.b16 %v151
    %v769 = vunpack.c.h.b16 %v151
    %v770 = vunpack.c.l.b16 %v152
    %v771 = vunpack.c.l.b16 %v153
    %v772 = vunpack.c.h.b16 %v153
    %v773 = vunpack.c.l.b16 %v154
    %v774 = vunpack.c.h.b16 %v154
    %v775 = vunpack.c.l.b16 %v155
    %v776 = vunpack.c.h.b16 %v155
    %v777 = vunpack.c.l.b16 %v156
    %v778 = vunpack.c.l.b16 %v157
    %v779 = vunpack.c.h.b16 %v157
    %v780 = vunpack.c.l.b16 %v158
    %v781 = vunpack.c.h.b16 %v158
    %v782 = vunpack.c.l.b16 %v159
    %v783 = vunpack.c.h.b16 %v159
    %v784 = vunpack.c.l.b16 %v160
    %v785 = vunpack.c.l.b16 %v161
    %v786 = vunpack.c.h.b16 %v161
    %v787 = vunpack.c.l.b16 %v162
    %v788 = vunpack.c.h.b16 %v162
    %v789 = vunpack.c.l.b16 %v163
    %v790 = vunpack.c.h.b16 %v163
    %v791 = vunpack.c.l.b16 %v164
    %v792 = vunpack.c.l.b16 %v165
    %v793 = vunpack.c.h.b16 %v165
    %v794 = vunpack.c.l.b16 %v166
    %v795 = vunpack.c.h.b16 %v166
    %v796 = vunpack.c.l.b16 %v167
    %v797 = vunpack.c.h.b16 %v167
    %v798 = vunpack.c.l.b16 %v168
    %v799 = vunpack.c.l.b16 %v169
    %v800 = vunpack.c.h.b16 %v169
    %v801 = vunpack.c.l.b16 %v170
    %v802 = vunpack.c.h.b16 %v170
    %v803 = vunpack.c.l.b16 %v171
    %v804 = vunpack.c.h.b16 %v171
    %v805 = vunpack.c.l.b16 %v172
    %v806 = vunpack.c.l.b16 %v173
    %v807 = vunpack.c.h.b16 %v173
    %v808 = vunpack.c.l.b16 %v174
    %v809 = vunpack.c.h.b16 %v174
    %v810 = vunpack.c.l.b16 %v175
    %v811 = vunpack.c.h.b16 %v175
    %v812 = vunpack.c.l.b16 %v176
    %v813 = vunpack.c.l.b16 %v177
    %v814 = vunpack.c.h.b16 %v177
    %v815 = vunpack.c.l.b16 %v178
    %v816 = vunpack.c.h.b16 %v178
    %v817 = vunpack.c.l.b16 %v179
    %v818 = vunpack.c.h.b16 %v179
    %v819 = vunpack.c.l.b16 %v180
    %v820 = vunpack.c.l.b16 %v181
    %v821 = vunpack.c.h.b16 %v181
    %v822 = vunpack.c.l.b16 %v182
    %v823 = vunpack.c.h.b16 %v182
    %v824 = vunpack.c.l.b16 %v183
    %v825 = vunpack.c.h.b16 %v183
    %v826 = vunpack.c.l.b16 %v184
    %v827 = vunpack.c.l.b16 %v185
    %v828 = vunpack.c.h.b16 %v185
    %v829 = vunpack.c.l.b16 %v186
    %v830 = vunpack.c.h.b16 %v186
    %v831 = vunpack.c.l.b16 %v187
    %v832 = vunpack.c.h.b16 %v187
    %v833 = vunpack.c.l.b16 %v188
    %v834 = vunpack.c.l.b16 %v189
    %v835 = vunpack.c.h.b16 %v189
    %v836 = vunpack.c.l.b16 %v190
    %v837 = vunpack.c.h.b16 %v190
    %v838 = vunpack.c.l.b16 %v191
    %v839 = vunpack.c.h.b16 %v191
    %v840 = vunpack.c.l.b16 %v192
    %v841 = vunpack.c.l.b16 %v193
    %v842 = vunpack.c.h.b16 %v193
    %v843 = vunpack.c.l.b16 %v194
    %v844 = vunpack.c.h.b16 %v194
    %v845 = vunpack.c.l.b16 %v195
    %v846 = vunpack.c.h.b16 %v195
    %v847 = vunpack.c.l.b16 %v196
    %v848 = vunpack.c.l.b16 %v197
    %v849 = vunpack.c.h.b16 %v197
    %v850 = vunpack.c.l.b16 %v198
    %v851 = vunpack.c.h.b16 %v198
    %v852 = vunpack.c.l.b16 %v199
    %v853 = vunpack.c.h.b16 %v199
    %v854 = vunpack.c.l.b16 %v200
    %v855 = vunpack.c.l.b16 %v201
    %v856 = vunpack.c.h.b16 %v201
    %v857 = vunpack.c.l.b16 %v202
    %v858 = vunpack.c.h.b16 %v202
    %v859 = vunpack.c.l.b16 %v203
    %v860 = vunpack.c.h.b16 %v203
    %v861 = vunpack.c.l.b16 %v204
    %v862 = vunpack.c.l.b16 %v205
    %v863 = vunpack.c.h.b16 %v205
    %v864 = vunpack.c.l.b16 %v206
    %v865 = vunpack.c.h.b16 %v206
    %v866 = vunpack.c.l.b16 %v207
    %v867 = vunpack.c.h.b16 %v207
    %v868 = vunpack.c.l.b16 %v208
    %v869 = vunpack.c.l.b16 %v209
    %v870 = vunpack.c.h.b16 %v209
    %v871 = vunpack.c.l.b16 %v210
    %v872 = vunpack.c.h.b16 %v210
    %v873 = vunpack.c.l.b16 %v211
    %v874 = vunpack.c.h.b16 %v211
    %v875 = vunpack.c.l.b16 %v212
    %v876 = vunpack.c.l.b16 %v213
    %v877 = vunpack.c.h.b16 %v213
    %v878 = vunpack.c.l.b16 %v214
    %v879 = vunpack.c.h.b16 %v214
    %v880 = vunpack.c.l.b16 %v215
    %v881 = vunpack.c.h.b16 %v215
    %v882 = vunpack.c.l.b16 %v216
    %v883 = vunpack.c.l.b16 %v217
    %v884 = vunpack.c.h.b16 %v217
    %v885 = vunpack.c.l.b16 %v218
    %v886 = vunpack.c.h.b16 %v218
    %v887 = vunpack.c.l.b16 %v219
    %v888 = vunpack.c.h.b16 %v219
    %v889 = vunpack.c.l.b16 %v220
    %v890 = vunpack.c.l.b16 %v221
    %v891 = vunpack.c.h.b16 %v221
    %v892 = vunpack.c.l.b16 %v222
    %v893 = vunpack.c.h.b16 %v222
    %v894 = vunpack.c.l.b16 %v223
    %v895 = vunpack.c.h.b16 %v223
    %v896 = vunpack.c.l.b16 %v224
    %v897 = vunpack.c.l.b16 %v225
    %v898 = vunpack.c.h.b16 %v225
    %v899 = vunpack.c.l.b16 %v226
    %v900 = vunpack.c.h.b16 %v226
    %v901 = vunpack.c.l.b16 %v227
    %v902 = vunpack.c.h.b16 %v227
    %v903 = vunpack.c.l.b16 %v228
    %v904 = vunpack.c.l.b16 %v229
    %v905 = vunpack.c.h.b16 %v229
    %v906 = vunpack.c.l.b16 %v230
    %v907 = vunpack.c.h.b16 %v230
    %v908 = vunpack.c.l.b16 %v231
    %v909 = vunpack.c.h.b16 %v231
    %v910 = vunpack.c.l.b16 %v232
    %v911 = vunpack.c.l.b16 %v233
    %v912 = vunpack.c.h.b16 %v233
    %v913 = vunpack.c.l.b16 %v234
    %v914 = vunpack.c.h.b16 %v234
    %v915 = vunpack.c.l.b16 %v235
    %v916 = vunpack.c.h.b16 %v235
    %v917 = vunpack.c.l.b16 %v236
    %v918 = vunpack.c.l.b16 %v237
    %v919 = vunpack.c.h.b16 %v237
    %v920 = vunpack.c.l.b16 %v238
    %v921 = vunpack.c.h.b16 %v238
    %v922 = vunpack.c.l.b16 %v239
    %v923 = vunpack.c.h.b16 %v239
    %v924 = vunpack.c.l.b16 %v240
    %v925 = vunpack.c.l.b16 %v241
    %v926 = vunpack.c.h.b16 %v241
    %v927 = vunpack.c.l.b16 %v242
    %v928 = vunpack.c.h.b16 %v242
    %v929 = vunpack.c.l.b16 %v243
    %v930 = vunpack.c.h.b16 %v243
    %v931 = vunpack.c.l.b16 %v244
    %v932 = vunpack.c.l.b16 %v245
    %v933 = vunpack.c.h.b16 %v245
    %v934 = vunpack.c.l.b16 %v246
    %v935 = vunpack.c.h.b16 %v246
    %v936 = vunpack.c.l.b16 %v247
    %v937 = vunpack.c.h.b16 %v247
    %v938 = vunpack.c.l.b16 %v248
    %v939 = vunpack.c.l.b16 %v249
    %v940 = vunpack.c.h.b16 %v249
    %v941 = vunpack.c.l.b16 %v250
    %v942 = vunpack.c.h.b16 %v250
    %v943 = vunpack.c.l.b16 %v251
    %v944 = vunpack.c.h.b16 %v251
    %v945 = vunpack.c.l.b16 %v252
    %v946 = vunpack.c.l.b16 %v253
    %v947 = vunpack.c.h.b16 %v253
    %v948 = vunpack.c.l.b16 %v254
    %v949 = vunpack.c.h.b16 %v254
    %v950 = vunpack.c.l.b16 %v255
    %v951 = vunpack.c.h.b16 %v255
    %v952 = vunpack.c.l.b16 %v256
    %v953 = vunpack.c.l.b16 %v257
    %v954 = vunpack.c.h.b16 %v257
    %v955 = vunpack.c.l.b16 %v258
    %v956 = vunpack.c.h.b16 %v258
    %v957 = vunpack.c.l.b16 %v259
    %v958 = vunpack.c.h.b16 %v259
    %v959 = vunpack.c.l.b16 %v260
    %v960 = vunpack.c.l.b16 %v261
    %v961 = vunpack.c.h.b16 %v261
    %v962 = vunpack.c.l.b16 %v262
    %v963 = vunpack.c.h.b16 %v262
    %v964 = vunpack.c.l.b16 %v263
    %v965 = vunpack.c.h.b16 %v263
    %v966 = vunpack.c.l.b16 %v264
    %v967 = vunpack.c.l.b16 %v265
    %v968 = vunpack.c.h.b16 %v265
    %v969 = vunpack.c.l.b16 %v266
    %v970 = vunpack.c.h.b16 %v266
    %v971 = vunpack.c.l.b16 %v267
    %v972 = vunpack.c.h.b16 %v267
    %v973 = vunpack.c.l.b16 %v268
    %v974 = vunpack.c.l.b16 %v269
    %v975 = vunpack.c.h.b16 %v269
    %v976 = vunpack.c.l.b16 %v270
    %v977 = vunpack.c.h.b16 %v270
    %v978 = vunpack.c.l.b16 %v271
    %v979 = vunpack.c.h.b16 %v271
    %v980 = vunpack.c.l.b16 %v272
    %v981 = vunpack.c.l.b16 %v273
    %v982 = vunpack.c.h.b16 %v273
    %v983 = vunpack.c.l.b16 %v274
    %v984 = vunpack.c.h.b16 %v274
    %v985 = vunpack.c.l.b16 %v275
    %v986 = vunpack.c.h.b16 %v275
    %v987 = vunpack.c.l.b16 %v276
    %v988 = vunpack.c.l.b16 %v277
    %v989 = vunpack.c.h.b16 %v277
    %v990 = vunpack.c.l.b16 %v278
    %v991 = vunpack.c.h.b16 %v278
    %v992 = vunpack.c.l.b16 %v279
    %v993 = vunpack.c.h.b16 %v279
    %v994 = vunpack.c.l.b16 %v280
    %v995 = vunpack.c.l.b16 %v281
    %v996 = vunpack.c.h.b16 %v281
    %v997 = vunpack.c.l.b16 %v282
    %v998 = vunpack.c.h.b16 %v282
    %v999 = vunpack.c.l.b16 %v283
    %v1000 = vunpack.c.h.b16 %v283
    %v1001 = vunpack.c.l.b16 %v284
    %v1002 = vunpack.c.l.b16 %v285
    %v1003 = vunpack.c.h.b16 %v285
    %v1004 = vunpack.c.l.b16 %v286
    %v1005 = vunpack.c.h.b16 %v286
    %v1006 = vunpack.c.l.b16 %v287
    %v1007 = vunpack.c.h.b16 %v287
    %v1008 = vunpack.c.l.b16 %v288
    %v1009 = vunpack.c.l.b16 %v289
    %v1010 = vunpack.c.h.b16 %v289
    %v1011 = vunpack.c.l.b16 %v290
    %v1012 = vunpack.c.h.b16 %v290
    %v1013 = vunpack.c.l.b16 %v291
    %v1014 = vunpack.c.h.b16 %v291
    %v1015 = vunpack.c.l.b16 %v292
    %v1016 = vunpack.c.l.b16 %v293
    %v1017 = vunpack.c.h.b16 %v293
    %v1018 = vunpack.c.l.b16 %v294
    %v1019 = vunpack.c.h.b16 %v294
    %v1020 = vunpack.c.l.b16 %v295
    %v1021 = vunpack.c.h.b16 %v295
    %v1022 = vunpack.c.l.b16 %v296
    %v1023 = vunpack.c.l.b16 %v297
    %v1024 = vunpack.c.h.b16 %v297
    %v1025 = vunpack.c.l.b16 %v298
    %v1026 = vunpack.c.h.b16 %v298
    %v1027 = vunpack.c.l.b16 %v299
    %v1028 = vunpack.c.h.b16 %v299
    %v1029 = vunpack.c.l.b16 %v300
    %v1030 = vunpack.c.l.b16 %v301
    %v1031 = vunpack.c.h.b16 %v301
    %v1032 = vunpack.c.l.b16 %v302
    %v1033 = vunpack.c.h.b16 %v302
    %v1034 = vunpack.c.l.b16 %v303
    %v1035 = vunpack.c.h.b16 %v303
    %v1036 = vunpack.c.l.b16 %v304
    %v1037 = vpack.c.b16 %v610, %v603
    %v1038 = vpack.c.b16 %v611, %v604
    %v1039 = vpack.c.b16 %v612, %v605
    %v1040 = vpack.c.b16 %v613, %v606
    %v1041 = vpack.c.b16 %v614, %v607
    %v1042 = vpack.c.b16 %v615, %v608
    %v1043 = vpack.c.b16 %v616, %v609
    %v1044 = vpack.c.b16 %v624, %v617
    %v1045 = vpack.c.b16 %v625, %v618
    %v1046 = vpack.c.b16 %v626, %v619
    %v1047 = vpack.c.b16 %v627, %v620
    %v1048 = vpack.c.b16 %v628, %v621
    %v1049 = vpack.c.b16 %v629, %v622
    %v1050 = vpack.c.b16 %v630, %v623
    %v1051 = vpack.c.b16 %v638, %v631
    %v1052 = vpack.c.b16 %v639, %v632
    %v1053 = vpack.c.b16 %v640, %v633
    %v1054 = vpack.c.b16 %v641, %v634
    %v1055 = vpack.c.b16 %v642, %v635
    %v1056 = vpack.c.b16 %v643, %v636
    %v1057 = vpack.c.b16 %v644, %v637
    %v1058 = vpack.c.b16 %v652, %v645
    %v1059 = vpack.c.b16 %v653, %v646
    %v1060 = vpack.c.b16 %v654, %v647
    %v1061 = vpack.c.b16 %v655, %v648
    %v1062 = vpack.c.b16 %v656, %v649
    %v1063 = vpack.c.b16 %v657, %v650
    %v1064 = vpack.c.b16 %v658, %v651
    %v1065 = vpack.c.b16 %v666, %v659
    %v1066 = vpack.c.b16 %v667, %v660
    %v1067 = vpack.c.b16 %v668, %v661
    %v1068 = vpack.c.b16 %v669, %v662
    %v1069 = vpack.c.b16 %v670, %v663
    %v1070 = vpack.c.b16 %v671, %v664
    %v1071 = vpack.c.b16 %v672, %v665
    %v1072 = vpack.c.b16 %v680, %v673
    %v1073 = vpack.c.b16 %v681, %v674
    %v1074 = vpack.c.b16 %v682, %v675
    %v1075 = vpack.c.b16 %v683, %v676
    %v1076 = vpack.c.b16 %v684, %v677
    %v1077 = vpack.c.b16 %v685, %v678
    %v1078 = vpack.c.b16 %v686, %v679
    %v1079 = vpack.c.b16 %v694, %v687
    %v1080 = vpack.c.b16 %v695, %v688
    %v1081 = vpack.c.b16 %v696, %v689
    %v1082 = vpack.c.b16 %v697, %v690
    %v1083 = vpack.c.b16 %v698, %v691
    %v1084 = vpack.c.b16 %v699, %v692
    %v1085 = vpack.c.b16 %v700, %v693
    %v1086 = vpack.c.b16 %v708, %v701
    %v1087 = vpack.c.b16 %v709, %v702
    %v1088 = vpack.c.b16 %v710, %v703
    %v1089 = vpack.c.b16 %v711, %v704
    %v1090 = vpack.c.b16 %v712, %v705
    %v1091 = vpack.c.b16 %v713, %v706
    %v1092 = vpack.c.b16 %v714, %v707
    %v1093 = vpack.c.b16 %v722, %v715
    %v1094 = vpack.c.b16 %v723, %v716
    %v1095 = vpack.c.b16 %v724, %v717
    %v1096 = vpack.c.b16 %v725, %v718
    %v1097 = vpack.c.b16 %v726, %v719
    %v1098 = vpack.c.b16 %v727, %v720
    %v1099 = vpack.c.b16 %v728, %v721
    %v1100 = vpack.c.b16 %v736, %v729
    %v1101 = vpack.c.b16 %v737, %v730
    %v1102 = vpack.c.b16 %v738, %v731
    %v1103 = vpack.c.b16 %v739, %v732
    %v1104 = vpack.c.b16 %v740, %v733
    %v1105 = vpack.c.b16 %v741, %v734
    %v1106 = vpack.c.b16 %v742, %v735
    %v1107 = vpack.c.b16 %v750, %v743
    %v1108 = vpack.c.b16 %v751, %v744
    %v1109 = vpack.c.b16 %v752, %v745
    %v1110 = vpack.c.b16 %v753, %v746
    %v1111 = vpack.c.b16 %v754, %v747
    %v1112 = vpack.c.b16 %v755, %v748
    %v1113 = vpack.c.b16 %v756, %v749
    %v1114 = vpack.c.b16 %v764, %v757
    %v1115 = vpack.c.b16 %v765, %v758
    %v1116 = vpack.c.b16 %v766, %v759
    %v1117 = vpack.c.b16 %v767, %v760
    %v1118 = vpack.c.b16 %v768, %v761
    %v1119 = vpack.c.b16 %v769, %v762
    %v1120 = vpack.c.b16 %v770, %v763
    %v1121 = vpack.c.b16 %v778, %v771
    %v1122 = vpack.c.b16 %v779, %v772
    %v1123 = vpack.c.b16 %v780, %v773
    %v1124 = vpack.c.b16 %v781, %v774
    %v1125 = vpack.c.b16 %v782, %v775
    %v1126 = vpack.c.b16 %v783, %v776
    %v1127 = vpack.c.b16 %v784, %v777
    %v1128 = vpack.c.b16 %v792, %v785
    %v1129 = vpack.c.b16 %v793, %v786
    %v1130 = vpack.c.b16 %v794, %v787
    %v1131 = vpack.c.b16 %v795, %v788
    %v1132 = vpack.c.b16 %v796, %v789
    %v1133 = vpack.c.b16 %v797, %v790
    %v1134 = vpack.c.b16 %v798, %v791
    %v1135 = vpack.c.b16 %v806, %v799
    %v1136 = vpack.c.b16 %v807, %v800
    %v1137 = vpack.c.b16 %v808, %v801
    %v1138 = vpack.c.b16 %v809, %v802
    %v1139 = vpack.c.b16 %v810, %v803
    %v1140 = vpack.c.b16 %v811, %v804
    %v1141 = vpack.c.b16 %v812, %v805
    %v1142 = vpack.c.b16 %v820, %v813
    %v1143 = vpack.c.b16 %v821, %v814
    %v1144 = vpack.c.b16 %v822, %v815
    %v1145 = vpack.c.b16 %v823, %v816
    %v1146 = vpack.c.b16 %v824, %v817
    %v1147 = vpack.c.b16 %v825, %v818
    %v1148 = vpack.c.b16 %v826, %v819
    %v1149 = vpack.c.b16 %v834, %v827
    %v1150 = vpack.c.b16 %v835, %v828
    %v1151 = vpack.c.b16 %v836, %v829
    %v1152 = vpack.c.b16 %v837, %v830
    %v1153 = vpack.c.b16 %v838, %v831
    %v1154 = vpack.c.b16 %v839, %v832
    %v1155 = vpack.c.b16 %v840, %v833
    %v1156 = vpack.c.b16 %v848, %v841
    %v1157 = vpack.c.b16 %v849, %v842
    %v1158 = vpack.c.b16 %v850, %v843
    %v1159 = vpack.c.b16 %v851, %v844
    %v1160 = vpack.c.b16 %v852, %v845
    %v1161 = vpack.c.b16 %v853, %v846
    %v1162 = vpack.c.b16 %v854, %v847
    %v1163 = vpack.c.b16 %v862, %v855
    %v1164 = vpack.c.b16 %v863, %v856
    %v1165 = vpack.c.b16 %v864, %v857
    %v1166 = vpack.c.b16 %v865, %v858
    %v1167 = vpack.c.b16 %v866, %v859
    %v1168 = vpack.c.b16 %v867, %v860
    %v1169 = vpack.c.b16 %v868, %v861
    %v1170 = vpack.c.b16 %v876, %v869
    %v1171 = vpack.c.b16 %v877, %v870
    %v1172 = vpack.c.b16 %v878, %v871
    %v1173 = vpack.c.b16 %v879, %v872
    %v1174 = vpack.c.b16 %v880, %v873
    %v1175 = vpack.c.b16 %v881, %v874
    %v1176 = vpack.c.b16 %v882, %v875
    %v1177 = vpack.c.b16 %v890, %v883
    %v1178 = vpack.c.b16 %v891, %v884
    %v1179 = vpack.c.b16 %v892, %v885
    %v1180 = vpack.c.b16 %v893, %v886
    %v1181 = vpack.c.b16 %v894, %v887
    %v1182 = vpack.c.b16 %v895, %v888
    %v1183 = vpack.c.b16 %v896, %v889
    %v1184 = vpack.c.b16 %v904, %v897
    %v1185 = vpack.c.b16 %v905, %v898
    %v1186 = vpack.c.b16 %v906, %v899
    %v1187 = vpack.c.b16 %v907, %v900
    %v1188 = vpack.c.b16 %v908, %v901
    %v1189 = vpack.c.b16 %v909, %v902
    %v1190 = vpack.c.b16 %v910, %v903
    %v1191 = vpack.c.b16 %v918, %v911
    %v1192 = vpack.c.b16 %v919, %v912
    %v1193 = vpack.c.b16 %v920, %v913
    %v1194 = vpack.c.b16 %v921, %v914
    %v1195 = vpack.c.b16 %v922, %v915
    %v1196 = vpack.c.b16 %v923, %v916
    %v1197 = vpack.c.b16 %v924, %v917
    %v1198 = vpack.c.b16 %v932, %v925
    %v1199 = vpack.c.b16 %v933, %v926
    %v1200 = vpack.c.b16 %v934, %v927
    %v1201 = vpack.c.b16 %v935, %v928
    %v1202 = vpack.c.b16 %v936, %v929
    %v1203 = vpack.c.b16 %v937, %v930
    %v1204 = vpack.c.b16 %v938, %v931
    %v1205 = vpack.c.b16 %v946, %v939
    %v1206 = vpack.c.b16 %v947, %v940
    %v1207 = vpack.c.b16 %v948, %v941
    %v1208 = vpack.c.b16 %v949, %v942
    %v1209 = vpack.c.b16 %v950, %v943
    %v1210 = vpack.c.b16 %v951, %v944
    %v1211 = vpack.c.b16 %v952, %v945
    %v1212 = vpack.c.b16 %v960, %v953
    %v1213 = vpack.c.b16 %v961, %v954
    %v1214 = vpack.c.b16 %v962, %v955
    %v1215 = vpack.c.b16 %v963, %v956
    %v1216 = vpack.c.b16 %v964, %v957
    %v1217 = vpack.c.b16 %v965, %v958
    %v1218 = vpack.c.b16 %v966, %v959
    %v1219 = vpack.c.b16 %v974, %v967
    %v1220 = vpack.c.b16 %v975, %v968
    %v1221 = vpack.c.b16 %v976, %v969
    %v1222 = vpack.c.b16 %v977, %v970
    %v1223 = vpack.c.b16 %v978, %v971
    %v1224 = vpack.c.b16 %v979, %v972
    %v1225 = vpack.c.b16 %v980, %v973
    %v1226 = vpack.c.b16 %v988, %v981
    %v1227 = vpack.c.b16 %v989, %v982
    %v1228 = vpack.c.b16 %v990, %v983
    %v1229 = vpack.c.b16 %v991, %v984
    %v1230 = vpack.c.b16 %v992, %v985
    %v1231 = vpack.c.b16 %v993, %v986
    %v1232 = vpack.c.b16 %v994, %v987
    %v1233 = vpack.c.b16 %v1002, %v995
    %v1234 = vpack.c.b16 %v1003, %v996
    %v1235 = vpack.c.b16 %v1004, %v997
    %v1236 = vpack.c.b16 %v1005, %v998
    %v1237 = vpack.c.b16 %v1006, %v999
    %v1238 = vpack.c.b16 %v1007, %v1000
    %v1239 = vpack.c.b16 %v1008, %v1001
    %v1240 = vpack.c.b16 %v1016, %v1009
    %v1241 = vpack.c.b16 %v1017, %v1010
    %v1242 = vpack.c.b16 %v1018, %v1011
    %v1243 = vpack.c.b16 %v1019, %v1012
    %v1244 = vpack.c.b16 %v1020, %v1013
    %v1245 = vpack.c.b16 %v1021, %v1014
    %v1246 = vpack.c.b16 %v1022, %v1015
    %v1247 = vpack.c.b16 %v1030, %v1023
    %v1248 = vpack.c.b16 %v1031, %v1024
    %v1249 = vpack.c.b16 %v1032, %v1025
    %v1250 = vpack.c.b16 %v1033, %v1026
    %v1251 = vpack.c.b16 %v1034, %v1027
    %v1252 = vpack.c.b16 %v1035, %v1028
    %v1253 = vpack.c.b16 %v1036, %v1029
    %vm1464 = vcmask 867328
    %v1466 = vsel %vm1464, %v351, 0
    %vm1468 = vcmask 1044480
    %v1470 = vsel %vm1468, %v1247, 0
    %v1473 = vsel %vm1468, %v1248, 0
    %v1476 = vsel %vm1468, %v1249, 0
    %v1479 = vsel %vm1468, %v1250, 0
    %v1482 = vsel %vm1468, %v1251, 0
    %v1485 = vsel %vm1468, %v1252, 0
    %v1488 = vsel %vm1468, %v1253, 0
    %1490 = vmatprep.subr.bf16.mxu0 %v1087
    %1491 = vmatpush1.bf16.msra.mxu0 %v1086
    %1492 = vmatprep.subr.bf16.mxu0 %v1080
    %1493 = vmatpush1.bf16.msra.mxu0 %v1079
    %1494 = vmatprep.subr.bf16.mxu0 %v1073
    %1495 = vmatpush1.bf16.msra.mxu0 %v1072
    %1496 = vmatprep.subr.bf16.mxu0 %v1066
    %1497 = vmatpush1.bf16.msra.mxu0 %v1065
    %1498 = vmatprep.subr.bf16.mxu0 %v1059
    %1499 = vmatpush1.bf16.msra.mxu0 %v1058
    %1500 = vmatprep.subr.bf16.mxu0 %v1052
    %1501 = vmatpush1.bf16.msra.mxu0 %v1051
    %1502 = vmatprep.subr.bf16.mxu0 %v1045
    %1503 = vmatpush1.bf16.msra.mxu0 %v1044
    %1504 = vmatprep.subr.bf16.mxu0 %v1038
    %1505 = vmatpush1.bf16.msra.mxu0 %v1037
    %1506 = vmatprep.subr.bf16.mxu0 %v1143
    %1507 = vmatpush2.bf16.msra.mxu0 %v1142
    %1508 = vmatprep.subr.bf16.mxu0 %v1136
    %1509 = vmatpush2.bf16.msra.mxu0 %v1135
    %1510 = vmatprep.subr.bf16.mxu0 %v1129
    %1511 = vmatpush2.bf16.msra.mxu0 %v1128
    %1512 = vmatprep.subr.bf16.mxu0 %v1122
    %1513 = vmatpush2.bf16.msra.mxu0 %v1121
    %1514 = vmatprep.subr.bf16.mxu0 %v1115
    %1515 = vmatpush2.bf16.msra.mxu0 %v1114
    %1516 = vmatprep.subr.bf16.mxu0 %v1108
    %1517 = vmatpush2.bf16.msra.mxu0 %v1107
    %1518 = vmatprep.subr.bf16.mxu0 %v1101
    %1519 = vmatpush2.bf16.msra.mxu0 %v1100
    %1520 = vmatprep.subr.bf16.mxu0 %v1094
    %1521 = vmatpush2.bf16.msra.mxu0 %v1093
    %1522 = vmatprep.mubr.bf16.mxu0 %v349
    %1523 = vmatmul.mubr.bf16.gmra.mxu0 %v348
    %v1524 = vpop.f32.mrf.mxu0
    %v1525 = vadd.f32 %v310, %v1524
    %v1526 = vpop.f32.mrf.mxu0
    %v1527 = vadd.f32 %v314, %v1526
    %v1528 = vpop.f32.mrf.mxu0
    %v1529 = vpop.f32.mrf.mxu0
    %1530 = vdwg.mxu0
    %1531 = vmatprep.subr.bf16.mxu0 %v1199
    %1532 = vmatpush1.bf16.msra.mxu0 %v1198
    %1533 = vmatprep.subr.bf16.mxu0 %v1192
    %1534 = vmatpush1.bf16.msra.mxu0 %v1191
    %1535 = vmatprep.subr.bf16.mxu0 %v1185
    %1536 = vmatpush1.bf16.msra.mxu0 %v1184
    %1537 = vmatprep.subr.bf16.mxu0 %v1178
    %1538 = vmatpush1.bf16.msra.mxu0 %v1177
    %1539 = vmatprep.subr.bf16.mxu0 %v1171
    %1540 = vmatpush1.bf16.msra.mxu0 %v1170
    %1541 = vmatprep.subr.bf16.mxu0 %v1164
    %1542 = vmatpush1.bf16.msra.mxu0 %v1163
    %1543 = vmatprep.subr.bf16.mxu0 %v1157
    %1544 = vmatpush1.bf16.msra.mxu0 %v1156
    %1545 = vmatprep.subr.bf16.mxu0 %v1150
    %1546 = vmatpush1.bf16.msra.mxu0 %v1149
    %1547 = vmatprep.subr.bf16.mxu0 0
    %1548 = vmatpush2.bf16.msra.mxu0 0
    %1549 = vmatprep.subr.bf16.mxu0 %v1473
    %1550 = vmatpush2.bf16.msra.mxu0 %v1470
    %1551 = vmatprep.subr.bf16.mxu0 %v1241
    %1552 = vmatpush2.bf16.msra.mxu0 %v1240
    %1553 = vmatprep.subr.bf16.mxu0 %v1234
    %1554 = vmatpush2.bf16.msra.mxu0 %v1233
    %1555 = vmatprep.subr.bf16.mxu0 %v1227
    %1556 = vmatpush2.bf16.msra.mxu0 %v1226
    %1557 = vmatprep.subr.bf16.mxu0 %v1220
    %1558 = vmatpush2.bf16.msra.mxu0 %v1219
    %1559 = vmatprep.subr.bf16.mxu0 %v1213
    %1560 = vmatpush2.bf16.msra.mxu0 %v1212
    %1561 = vmatprep.subr.bf16.mxu0 %v1206
    %1562 = vmatpush2.bf16.msra.mxu0 %v1205
    %1563 = vmatprep.mubr.bf16.mxu0 %v1466
    %1564 = vmatmul.mubr.bf16.gmra.mxu0 %v350
    %v1565 = vpop.f32.mrf.mxu0
    %v1566 = vadd.f32 %v1525, %v1565
    %v1567 = vpop.f32.mrf.mxu0
    %v1568 = vadd.f32 %v1527, %v1567
    %v1569 = vpop.f32.mrf.mxu0
    %v1570 = vpop.f32.mrf.mxu0
    %1571 = vdwg.mxu0
    %1572 = vmatprep.subr.bf16.mxu0 %v1089
    %1573 = vmatpush1.bf16.msra.mxu0 %v1088
    %1574 = vmatprep.subr.bf16.mxu0 %v1082
    %1575 = vmatpush1.bf16.msra.mxu0 %v1081
    %1576 = vmatprep.subr.bf16.mxu0 %v1075
    %1577 = vmatpush1.bf16.msra.mxu0 %v1074
    %1578 = vmatprep.subr.bf16.mxu0 %v1068
    %1579 = vmatpush1.bf16.msra.mxu0 %v1067
    %1580 = vmatprep.subr.bf16.mxu0 %v1061
    %1581 = vmatpush1.bf16.msra.mxu0 %v1060
    %1582 = vmatprep.subr.bf16.mxu0 %v1054
    %1583 = vmatpush1.bf16.msra.mxu0 %v1053
    %1584 = vmatprep.subr.bf16.mxu0 %v1047
    %1585 = vmatpush1.bf16.msra.mxu0 %v1046
    %1586 = vmatprep.subr.bf16.mxu0 %v1040
    %1587 = vmatpush1.bf16.msra.mxu0 %v1039
    %1588 = vmatprep.subr.bf16.mxu0 %v1145
    %1589 = vmatpush2.bf16.msra.mxu0 %v1144
    %1590 = vmatprep.subr.bf16.mxu0 %v1138
    %1591 = vmatpush2.bf16.msra.mxu0 %v1137
    %1592 = vmatprep.subr.bf16.mxu0 %v1131
    %1593 = vmatpush2.bf16.msra.mxu0 %v1130
    %1594 = vmatprep.subr.bf16.mxu0 %v1124
    %1595 = vmatpush2.bf16.msra.mxu0 %v1123
    %1596 = vmatprep.subr.bf16.mxu0 %v1117
    %1597 = vmatpush2.bf16.msra.mxu0 %v1116
    %1598 = vmatprep.subr.bf16.mxu0 %v1110
    %1599 = vmatpush2.bf16.msra.mxu0 %v1109
    %1600 = vmatprep.subr.bf16.mxu0 %v1103
    %1601 = vmatpush2.bf16.msra.mxu0 %v1102
    %1602 = vmatprep.subr.bf16.mxu0 %v1096
    %1603 = vmatpush2.bf16.msra.mxu0 %v1095
    %1604 = vmatprep.mubr.bf16.mxu0 %v349
    %1605 = vmatmul.mubr.bf16.gmra.mxu0 %v348
    %v1606 = vpop.f32.mrf.mxu0
    %v1607 = vadd.f32 %v318, %v1606
    %v1608 = vpop.f32.mrf.mxu0
    %v1609 = vadd.f32 %v322, %v1608
    %v1610 = vpop.f32.mrf.mxu0
    %v1611 = vpop.f32.mrf.mxu0
    %1612 = vdwg.mxu0
    %1613 = vmatprep.subr.bf16.mxu0 %v1201
    %1614 = vmatpush1.bf16.msra.mxu0 %v1200
    %1615 = vmatprep.subr.bf16.mxu0 %v1194
    %1616 = vmatpush1.bf16.msra.mxu0 %v1193
    %1617 = vmatprep.subr.bf16.mxu0 %v1187
    %1618 = vmatpush1.bf16.msra.mxu0 %v1186
    %1619 = vmatprep.subr.bf16.mxu0 %v1180
    %1620 = vmatpush1.bf16.msra.mxu0 %v1179
    %1621 = vmatprep.subr.bf16.mxu0 %v1173
    %1622 = vmatpush1.bf16.msra.mxu0 %v1172
    %1623 = vmatprep.subr.bf16.mxu0 %v1166
    %1624 = vmatpush1.bf16.msra.mxu0 %v1165
    %1625 = vmatprep.subr.bf16.mxu0 %v1159
    %1626 = vmatpush1.bf16.msra.mxu0 %v1158
    %1627 = vmatprep.subr.bf16.mxu0 %v1152
    %1628 = vmatpush1.bf16.msra.mxu0 %v1151
    %1629 = vmatprep.subr.bf16.mxu0 0
    %1630 = vmatpush2.bf16.msra.mxu0 0
    %1631 = vmatprep.subr.bf16.mxu0 %v1479
    %1632 = vmatpush2.bf16.msra.mxu0 %v1476
    %1633 = vmatprep.subr.bf16.mxu0 %v1243
    %1634 = vmatpush2.bf16.msra.mxu0 %v1242
    %1635 = vmatprep.subr.bf16.mxu0 %v1236
    %1636 = vmatpush2.bf16.msra.mxu0 %v1235
    %1637 = vmatprep.subr.bf16.mxu0 %v1229
    %1638 = vmatpush2.bf16.msra.mxu0 %v1228
    %1639 = vmatprep.subr.bf16.mxu0 %v1222
    %1640 = vmatpush2.bf16.msra.mxu0 %v1221
    %1641 = vmatprep.subr.bf16.mxu0 %v1215
    %1642 = vmatpush2.bf16.msra.mxu0 %v1214
    %1643 = vmatprep.subr.bf16.mxu0 %v1208
    %1644 = vmatpush2.bf16.msra.mxu0 %v1207
    %1645 = vmatprep.mubr.bf16.mxu0 %v1466
    %1646 = vmatmul.mubr.bf16.gmra.mxu0 %v350
    %v1647 = vpop.f32.mrf.mxu0
    %v1648 = vadd.f32 %v1607, %v1647
    %v1649 = vpop.f32.mrf.mxu0
    %v1650 = vadd.f32 %v1609, %v1649
    %v1651 = vpop.f32.mrf.mxu0
    %v1652 = vpop.f32.mrf.mxu0
    %1653 = vdwg.mxu0
    %1654 = vmatprep.subr.bf16.mxu0 %v1091
    %1655 = vmatpush1.bf16.msra.mxu0 %v1090
    %1656 = vmatprep.subr.bf16.mxu0 %v1084
    %1657 = vmatpush1.bf16.msra.mxu0 %v1083
    %1658 = vmatprep.subr.bf16.mxu0 %v1077
    %1659 = vmatpush1.bf16.msra.mxu0 %v1076
    %1660 = vmatprep.subr.bf16.mxu0 %v1070
    %1661 = vmatpush1.bf16.msra.mxu0 %v1069
    %1662 = vmatprep.subr.bf16.mxu0 %v1063
    %1663 = vmatpush1.bf16.msra.mxu0 %v1062
    %1664 = vmatprep.subr.bf16.mxu0 %v1056
    %1665 = vmatpush1.bf16.msra.mxu0 %v1055
    %1666 = vmatprep.subr.bf16.mxu0 %v1049
    %1667 = vmatpush1.bf16.msra.mxu0 %v1048
    %1668 = vmatprep.subr.bf16.mxu0 %v1042
    %1669 = vmatpush1.bf16.msra.mxu0 %v1041
    %1670 = vmatprep.subr.bf16.mxu0 %v1147
    %1671 = vmatpush2.bf16.msra.mxu0 %v1146
    %1672 = vmatprep.subr.bf16.mxu0 %v1140
    %1673 = vmatpush2.bf16.msra.mxu0 %v1139
    %1674 = vmatprep.subr.bf16.mxu0 %v1133
    %1675 = vmatpush2.bf16.msra.mxu0 %v1132
    %1676 = vmatprep.subr.bf16.mxu0 %v1126
    %1677 = vmatpush2.bf16.msra.mxu0 %v1125
    %1678 = vmatprep.subr.bf16.mxu0 %v1119
    %1679 = vmatpush2.bf16.msra.mxu0 %v1118
    %1680 = vmatprep.subr.bf16.mxu0 %v1112
    %1681 = vmatpush2.bf16.msra.mxu0 %v1111
    %1682 = vmatprep.subr.bf16.mxu0 %v1105
    %1683 = vmatpush2.bf16.msra.mxu0 %v1104
    %1684 = vmatprep.subr.bf16.mxu0 %v1098
    %1685 = vmatpush2.bf16.msra.mxu0 %v1097
    %1686 = vmatprep.mubr.bf16.mxu0 %v349
    %1687 = vmatmul.mubr.bf16.gmra.mxu0 %v348
    %v1688 = vpop.f32.mrf.mxu0
    %v1689 = vadd.f32 %v326, %v1688
    %v1690 = vpop.f32.mrf.mxu0
    %v1691 = vadd.f32 %v330, %v1690
    %v1692 = vpop.f32.mrf.mxu0
    %v1693 = vpop.f32.mrf.mxu0
    %1694 = vdwg.mxu0
    %1695 = vmatprep.subr.bf16.mxu0 %v1203
    %1696 = vmatpush1.bf16.msra.mxu0 %v1202
    %1697 = vmatprep.subr.bf16.mxu0 %v1196
    %1698 = vmatpush1.bf16.msra.mxu0 %v1195
    %1699 = vmatprep.subr.bf16.mxu0 %v1189
    %1700 = vmatpush1.bf16.msra.mxu0 %v1188
    %1701 = vmatprep.subr.bf16.mxu0 %v1182
    %1702 = vmatpush1.bf16.msra.mxu0 %v1181
    %1703 = vmatprep.subr.bf16.mxu0 %v1175
    %1704 = vmatpush1.bf16.msra.mxu0 %v1174
    %1705 = vmatprep.subr.bf16.mxu0 %v1168
    %1706 = vmatpush1.bf16.msra.mxu0 %v1167
    %1707 = vmatprep.subr.bf16.mxu0 %v1161
    %1708 = vmatpush1.bf16.msra.mxu0 %v1160
    %1709 = vmatprep.subr.bf16.mxu0 %v1154
    %1710 = vmatpush1.bf16.msra.mxu0 %v1153
    %1711 = vmatprep.subr.bf16.mxu0 0
    %1712 = vmatpush2.bf16.msra.mxu0 0
    %1713 = vmatprep.subr.bf16.mxu0 %v1485
    %1714 = vmatpush2.bf16.msra.mxu0 %v1482
    %1715 = vmatprep.subr.bf16.mxu0 %v1245
    %1716 = vmatpush2.bf16.msra.mxu0 %v1244
    %1717 = vmatprep.subr.bf16.mxu0 %v1238
    %1718 = vmatpush2.bf16.msra.mxu0 %v1237
    %1719 = vmatprep.subr.bf16.mxu0 %v1231
    %1720 = vmatpush2.bf16.msra.mxu0 %v1230
    %1721 = vmatprep.subr.bf16.mxu0 %v1224
    %1722 = vmatpush2.bf16.msra.mxu0 %v1223
    %1723 = vmatprep.subr.bf16.mxu0 %v1217
    %1724 = vmatpush2.bf16.msra.mxu0 %v1216
    %1725 = vmatprep.subr.bf16.mxu0 %v1210
    %1726 = vmatpush2.bf16.msra.mxu0 %v1209
    %1727 = vmatprep.mubr.bf16.mxu0 %v1466
    %1728 = vmatmul.mubr.bf16.gmra.mxu0 %v350
    %v1729 = vpop.f32.mrf.mxu0
    %v1730 = vadd.f32 %v1689, %v1729
    %v1731 = vpop.f32.mrf.mxu0
    %v1732 = vadd.f32 %v1691, %v1731
    %v1733 = vpop.f32.mrf.mxu0
    %v1734 = vpop.f32.mrf.mxu0
    %1735 = vdwg.mxu0
    %1736 = vmatprep.subr.bf16.mxu0 0
    %1737 = vmatpush1.bf16.msra.mxu0 %v1092
    %1738 = vmatprep.subr.bf16.mxu0 0
    %1739 = vmatpush1.bf16.msra.mxu0 %v1085
    %1740 = vmatprep.subr.bf16.mxu0 0
    %1741 = vmatpush1.bf16.msra.mxu0 %v1078
    %1742 = vmatprep.subr.bf16.mxu0 0
    %1743 = vmatpush1.bf16.msra.mxu0 %v1071
    %1744 = vmatprep.subr.bf16.mxu0 0
    %1745 = vmatpush1.bf16.msra.mxu0 %v1064
    %1746 = vmatprep.subr.bf16.mxu0 0
    %1747 = vmatpush1.bf16.msra.mxu0 %v1057
    %1748 = vmatprep.subr.bf16.mxu0 0
    %1749 = vmatpush1.bf16.msra.mxu0 %v1050
    %1750 = vmatprep.subr.bf16.mxu0 0
    %1751 = vmatpush1.bf16.msra.mxu0 %v1043
    %1752 = vmatprep.subr.bf16.mxu0 0
    %1753 = vmatpush2.bf16.msra.mxu0 %v1148
    %1754 = vmatprep.subr.bf16.mxu0 0
    %1755 = vmatpush2.bf16.msra.mxu0 %v1141
    %1756 = vmatprep.subr.bf16.mxu0 0
    %1757 = vmatpush2.bf16.msra.mxu0 %v1134
    %1758 = vmatprep.subr.bf16.mxu0 0
    %1759 = vmatpush2.bf16.msra.mxu0 %v1127
    %1760 = vmatprep.subr.bf16.mxu0 0
    %1761 = vmatpush2.bf16.msra.mxu0 %v1120
    %1762 = vmatprep.subr.bf16.mxu0 0
    %1763 = vmatpush2.bf16.msra.mxu0 %v1113
    %1764 = vmatprep.subr.bf16.mxu0 0
    %1765 = vmatpush2.bf16.msra.mxu0 %v1106
    %1766 = vmatprep.subr.bf16.mxu0 0
    %1767 = vmatpush2.bf16.msra.mxu0 %v1099
    %1768 = vmatprep.mubr.bf16.mxu0 %v349
    %1769 = vmatmul.mubr.bf16.gmra.mxu0 %v348
    %v1770 = vpop.f32.mrf.mxu0
    %v1771 = vadd.f32 %v334, %v1770
    %v1772 = vpop.f32.mrf.mxu0
    %v1773 = vpop.f32.mrf.mxu0
    %v1774 = vpop.f32.mrf.mxu0
    %1775 = vdwg.mxu0
    %1776 = vmatprep.subr.bf16.mxu0 0
    %1777 = vmatpush1.bf16.msra.mxu0 %v1204
    %1778 = vmatprep.subr.bf16.mxu0 0
    %1779 = vmatpush1.bf16.msra.mxu0 %v1197
    %1780 = vmatprep.subr.bf16.mxu0 0
    %1781 = vmatpush1.bf16.msra.mxu0 %v1190
    %1782 = vmatprep.subr.bf16.mxu0 0
    %1783 = vmatpush1.bf16.msra.mxu0 %v1183
    %1784 = vmatprep.subr.bf16.mxu0 0
    %1785 = vmatpush1.bf16.msra.mxu0 %v1176
    %1786 = vmatprep.subr.bf16.mxu0 0
    %1787 = vmatpush1.bf16.msra.mxu0 %v1169
    %1788 = vmatprep.subr.bf16.mxu0 0
    %1789 = vmatpush1.bf16.msra.mxu0 %v1162
    %1790 = vmatprep.subr.bf16.mxu0 0
    %1791 = vmatpush1.bf16.msra.mxu0 %v1155
    %1792 = vmatprep.subr.bf16.mxu0 0
    %1793 = vmatpush2.bf16.msra.mxu0 0
    %1794 = vmatprep.subr.bf16.mxu0 0
    %1795 = vmatpush2.bf16.msra.mxu0 %v1488
    %1796 = vmatprep.subr.bf16.mxu0 0
    %1797 = vmatpush2.bf16.msra.mxu0 %v1246
    %1798 = vmatprep.subr.bf16.mxu0 0
    %1799 = vmatpush2.bf16.msra.mxu0 %v1239
    %1800 = vmatprep.subr.bf16.mxu0 0
    %1801 = vmatpush2.bf16.msra.mxu0 %v1232
    %1802 = vmatprep.subr.bf16.mxu0 0
    %1803 = vmatpush2.bf16.msra.mxu0 %v1225
    %1804 = vmatprep.subr.bf16.mxu0 0
    %1805 = vmatpush2.bf16.msra.mxu0 %v1218
    %1806 = vmatprep.subr.bf16.mxu0 0
    %1807 = vmatpush2.bf16.msra.mxu0 %v1211
    %1808 = vmatprep.mubr.bf16.mxu0 %v1466
    %1809 = vmatmul.mubr.bf16.gmra.mxu0 %v350
    %v1810 = vpop.f32.mrf.mxu0
    %v1811 = vadd.f32 %v1771, %v1810
    %v1812 = vpop.f32.mrf.mxu0
    %v1813 = vpop.f32.mrf.mxu0
    %v1814 = vpop.f32.mrf.mxu0
    %1815 = vdwg.mxu0
    %v1816 = vmax.f32 %v1566, 0.0
    %v1817 = vmax.f32 %v1568, 0.0
    %v1818 = vmax.f32 %v1648, 0.0
    %v1819 = vmax.f32 %v1650, 0.0
    %v1820 = vmax.f32 %v1730, 0.0
    %v1821 = vmax.f32 %v1732, 0.0
    %v1822 = vmax.f32 %v1811, 0.0
    %v1823 = vpack.c.bf16 %v1816, %v1816
    %v1824 = vpack.c.bf16 %v1817, %v1817
    %v1825 = vpack.c.bf16 %v1818, %v1818
    %v1826 = vpack.c.bf16 %v1819, %v1819
    %v1827 = vpack.c.bf16 %v1820, %v1820
    %v1828 = vpack.c.bf16 %v1821, %v1821
    %v1829 = vpack.c.bf16 %v1822, %v1822
    %v1830 = vld [vmem:[#allocation4] sm:$0xff]
    %v1831 = vld [vmem:[#allocation4 + $0x8] sm:$0xff]
    %v1832 = vld [vmem:[#allocation4 + $0x10] sm:$0xff]
    %v1833 = vld [vmem:[#allocation4 + $0x18] sm:$0xff]
    %v1834 = vld [vmem:[#allocation4 + $0x20] sm:$0xff]
    %v1835 = vld [vmem:[#allocation4 + $0x28] sm:$0xff]
    %v1836 = vld [vmem:[#allocation4 + $0x30] sm:$0xff]
    %v1837 = vld [vmem:[#allocation4 + $0x38] sm:$0xff]
    %v1838 = vld [vmem:[#allocation4 + $0x40] sm:$0xff]
    %v1839 = vld [vmem:[#allocation4 + $0x48] sm:$0xff]
    %v1840 = vld [vmem:[#allocation4 + $0x50] sm:$0xff]
    %v1841 = vld [vmem:[#allocation4 + $0x58] sm:$0xff]
    %v1842 = vld [vmem:[#allocation4 + $0x60] sm:$0xff]
    %v1843 = vld [vmem:[#allocation4 + $0x68] sm:$0xff]
    %v1844 = vld [vmem:[#allocation4 + $0x70] sm:$0xff]
    %v1845 = vld [vmem:[#allocation4 + $0x78] sm:$0xff]
    %v1846 = vld [vmem:[#allocation4 + $0x80] sm:$0xff]
    %v1847 = vld [vmem:[#allocation4 + $0x88] sm:$0xff]
    %v1848 = vld [vmem:[#allocation4 + $0x90] sm:$0xff]
    %v1849 = vld [vmem:[#allocation4 + $0x98] sm:$0xff]
    %v1850 = vld [vmem:[#allocation4 + $0xa0] sm:$0xff]
    %v1851 = vld [vmem:[#allocation4 + $0xa8] sm:$0xff]
    %v1852 = vld [vmem:[#allocation4 + $0xb0] sm:$0xff]
    %v1853 = vld [vmem:[#allocation4 + $0xb8] sm:$0xff]
    %v1854 = vld [vmem:[#allocation4 + $0xc0] sm:$0xff]
    %v1855 = vld [vmem:[#allocation4 + $0xc8] sm:$0xff]
    %v1856 = vld [vmem:[#allocation4 + $0xd0] sm:$0xff]
    %v1857 = vld [vmem:[#allocation4 + $0xd8] sm:$0xff]
    %v1858 = vld [vmem:[#allocation4 + $0xe0] sm:$0xff]
    %v1859 = vld [vmem:[#allocation4 + $0xe8] sm:$0xff]
    %v1860 = vld [vmem:[#allocation4 + $0xf0] sm:$0xff]
    %v1861 = vld [vmem:[#allocation4 + $0xf8] sm:$0xff]
    %v1862 = vld [vmem:[#allocation4 + $0x100] sm:$0xff]
    %v1863 = vld [vmem:[#allocation4 + $0x108] sm:$0xff]
    %v1864 = vld [vmem:[#allocation4 + $0x110] sm:$0xff]
    %v1865 = vld [vmem:[#allocation4 + $0x118] sm:$0xff]
    %v1866 = vld [vmem:[#allocation4 + $0x120] sm:$0xff]
    %v1867 = vld [vmem:[#allocation4 + $0x128] sm:$0xff]
    %v1868 = vld [vmem:[#allocation4 + $0x130] sm:$0xff]
    %v1869 = vld [vmem:[#allocation4 + $0x138] sm:$0xff]
    %v1870 = vld [vmem:[#allocation4 + $0x140] sm:$0xff]
    %v1871 = vld [vmem:[#allocation4 + $0x148] sm:$0xff]
    %v1872 = vld [vmem:[#allocation4 + $0x150] sm:$0xff]
    %v1873 = vld [vmem:[#allocation4 + $0x158] sm:$0xff]
    %v1874 = vld [vmem:[#allocation4 + $0x160] sm:$0xff]
    %v1875 = vld [vmem:[#allocation4 + $0x168] sm:$0xff]
    %v1876 = vld [vmem:[#allocation4 + $0x170] sm:$0xff]
    %v1877 = vld [vmem:[#allocation4 + $0x178] sm:$0xff]
    %v1878 = vld [vmem:[#allocation4 + $0x180] sm:$0xff]
    %v1879 = vld [vmem:[#allocation4 + $0x188] sm:$0xff]
    %v1880 = vld [vmem:[#allocation4 + $0x190] sm:$0xff]
    %v1881 = vld [vmem:[#allocation4 + $0x198] sm:$0xff]
    %v1882 = vld [vmem:[#allocation4 + $0x1a0] sm:$0xff]
    %v1883 = vld [vmem:[#allocation4 + $0x1a8] sm:$0xff]
    %v1884 = vld [vmem:[#allocation4 + $0x1b0] sm:$0xff]
    %v1885 = vld [vmem:[#allocation4 + $0x1b8] sm:$0xff]
    %v1886 = vld [vmem:[#allocation4 + $0x1c0] sm:$0xff]
    %v1887 = vld [vmem:[#allocation4 + $0x1c8] sm:$0xff]
    %v1888 = vld [vmem:[#allocation4 + $0x1d0] sm:$0xff]
    %v1889 = vld [vmem:[#allocation4 + $0x1d8] sm:$0xff]
    %v1890 = vld [vmem:[#allocation4 + $0x1e0] sm:$0xff]
    %v1891 = vld [vmem:[#allocation4 + $0x1e8] sm:$0xff]
    %v1892 = vld [vmem:[#allocation4 + $0x1f0] sm:$0xff]
    %v1893 = vld [vmem:[#allocation4 + $0x1f8] sm:$0xff]
    %v1894 = vld [vmem:[#allocation4 + $0x200] sm:$0xff]
    %v1895 = vld [vmem:[#allocation4 + $0x208] sm:$0xff]
    %v1896 = vld [vmem:[#allocation4 + $0x210] sm:$0xff]
    %v1897 = vld [vmem:[#allocation4 + $0x218] sm:$0xff]
    %v1898 = vld [vmem:[#allocation4 + $0x220] sm:$0xff]
    %v1899 = vld [vmem:[#allocation4 + $0x228] sm:$0xff]
    %v1900 = vld [vmem:[#allocation4 + $0x230] sm:$0xff]
    %v1901 = vld [vmem:[#allocation4 + $0x238] sm:$0xff]
    %v1902 = vld [vmem:[#allocation4 + $0x240] sm:$0xff]
    %v1903 = vld [vmem:[#allocation4 + $0x248] sm:$0xff]
    %v1904 = vld [vmem:[#allocation4 + $0x250] sm:$0xff]
    %v1905 = vld [vmem:[#allocation4 + $0x258] sm:$0xff]
    %v1906 = vld [vmem:[#allocation4 + $0x260] sm:$0xff]
    %v1907 = vld [vmem:[#allocation4 + $0x268] sm:$0xff]
    %v1908 = vld [vmem:[#allocation4 + $0x270] sm:$0xff]
    %v1909 = vld [vmem:[#allocation4 + $0x278] sm:$0xff]
    %v1910 = vld [vmem:[#allocation4 + $0x280] sm:$0xff]
    %v1911 = vld [vmem:[#allocation4 + $0x288] sm:$0xff]
    %v1912 = vld [vmem:[#allocation4 + $0x290] sm:$0xff]
    %v1913 = vld [vmem:[#allocation4 + $0x298] sm:$0xff]
    %v1914 = vld [vmem:[#allocation4 + $0x2a0] sm:$0xff]
    %v1915 = vld [vmem:[#allocation4 + $0x2a8] sm:$0xff]
    %v1916 = vld [vmem:[#allocation4 + $0x2b0] sm:$0xff]
    %v1917 = vld [vmem:[#allocation4 + $0x2b8] sm:$0xff]
    %v1918 = vld [vmem:[#allocation4 + $0x2c0] sm:$0xff]
    %v1919 = vld [vmem:[#allocation4 + $0x2c8] sm:$0xff]
    %v1920 = vld [vmem:[#allocation4 + $0x2d0] sm:$0xff]
    %v1921 = vld [vmem:[#allocation4 + $0x2d8] sm:$0xff]
    %v1922 = vld [vmem:[#allocation4 + $0x2e0] sm:$0xff]
    %v1923 = vld [vmem:[#allocation4 + $0x2e8] sm:$0xff]
    %v1924 = vld [vmem:[#allocation4 + $0x2f0] sm:$0xff]
    %v1925 = vld [vmem:[#allocation4 + $0x2f8] sm:$0xff]
    %v1926 = vld [vmem:[#allocation4 + $0x300] sm:$0xff]
    %v1927 = vld [vmem:[#allocation4 + $0x308] sm:$0xff]
    %v1928 = vld [vmem:[#allocation4 + $0x310] sm:$0xff]
    %v1929 = vld [vmem:[#allocation4 + $0x318] sm:$0xff]
    %v1930 = vld [vmem:[#allocation4 + $0x320] sm:$0xff]
    %v1931 = vld [vmem:[#allocation4 + $0x328] sm:$0xff]
    %v1932 = vld [vmem:[#allocation4 + $0x330] sm:$0xff]
    %v1933 = vld [vmem:[#allocation4 + $0x338] sm:$0xff]
    %v1934 = vld [vmem:[#allocation4 + $0x340] sm:$0xff]
    %v1935 = vld [vmem:[#allocation4 + $0x348] sm:$0xff]
    %v1936 = vld [vmem:[#allocation4 + $0x350] sm:$0xff]
    %v1937 = vld [vmem:[#allocation4 + $0x358] sm:$0xff]
    %v1938 = vld [vmem:[#allocation4 + $0x360] sm:$0xff]
    %v1939 = vld [vmem:[#allocation4 + $0x368] sm:$0xff]
    %v1940 = vld [vmem:[#allocation4 + $0x370] sm:$0xff]
    %v1941 = vld [vmem:[#allocation4 + $0x378] sm:$0xff]
    %v1942 = vld [vmem:[%s4] sm:$0x3]
    %v1944 = vlaneseq
    %v1945 = vshrl.u32 %v1944, 7
    %v1946 = vsub.s32 0, %v1945
    %v1947 = vrot.slane %v1942, %v1946
    %v1948 = vlaneseq
    %v1949 = vshrl.u32 %v1948, 7
    %v1950 = vsub.s32 1, %v1949
    %v1951 = vrot.slane %v1942, %v1950
    %v2066 = vunpack.c.l.b16 %v1830
    %v2067 = vunpack.c.h.b16 %v1830
    %v2068 = vunpack.c.l.b16 %v1831
    %v2069 = vunpack.c.h.b16 %v1831
    %v2070 = vunpack.c.l.b16 %v1832
    %v2071 = vunpack.c.h.b16 %v1832
    %v2072 = vunpack.c.l.b16 %v1833
    %v2073 = vunpack.c.h.b16 %v1833
    %v2074 = vunpack.c.l.b16 %v1834
    %v2075 = vunpack.c.h.b16 %v1834
    %v2076 = vunpack.c.l.b16 %v1835
    %v2077 = vunpack.c.h.b16 %v1835
    %v2078 = vunpack.c.l.b16 %v1836
    %v2079 = vunpack.c.h.b16 %v1836
    %v2080 = vunpack.c.l.b16 %v1837
    %v2081 = vunpack.c.h.b16 %v1837
    %v2082 = vunpack.c.l.b16 %v1838
    %v2083 = vunpack.c.h.b16 %v1838
    %v2084 = vunpack.c.l.b16 %v1839
    %v2085 = vunpack.c.h.b16 %v1839
    %v2086 = vunpack.c.l.b16 %v1840
    %v2087 = vunpack.c.h.b16 %v1840
    %v2088 = vunpack.c.l.b16 %v1841
    %v2089 = vunpack.c.h.b16 %v1841
    %v2090 = vunpack.c.l.b16 %v1842
    %v2091 = vunpack.c.h.b16 %v1842
    %v2092 = vunpack.c.l.b16 %v1843
    %v2093 = vunpack.c.h.b16 %v1843
    %v2094 = vunpack.c.l.b16 %v1844
    %v2095 = vunpack.c.h.b16 %v1844
    %v2096 = vunpack.c.l.b16 %v1845
    %v2097 = vunpack.c.h.b16 %v1845
    %v2098 = vunpack.c.l.b16 %v1846
    %v2099 = vunpack.c.h.b16 %v1846
    %v2100 = vunpack.c.l.b16 %v1847
    %v2101 = vunpack.c.h.b16 %v1847
    %v2102 = vunpack.c.l.b16 %v1848
    %v2103 = vunpack.c.h.b16 %v1848
    %v2104 = vunpack.c.l.b16 %v1849
    %v2105 = vunpack.c.h.b16 %v1849
    %v2106 = vunpack.c.l.b16 %v1850
    %v2107 = vunpack.c.h.b16 %v1850
    %v2108 = vunpack.c.l.b16 %v1851
    %v2109 = vunpack.c.h.b16 %v1851
    %v2110 = vunpack.c.l.b16 %v1852
    %v2111 = vunpack.c.h.b16 %v1852
    %v2112 = vunpack.c.l.b16 %v1853
    %v2113 = vunpack.c.h.b16 %v1853
    %v2114 = vunpack.c.l.b16 %v1854
    %v2115 = vunpack.c.h.b16 %v1854
    %v2116 = vunpack.c.l.b16 %v1855
    %v2117 = vunpack.c.h.b16 %v1855
    %v2118 = vunpack.c.l.b16 %v1856
    %v2119 = vunpack.c.h.b16 %v1856
    %v2120 = vunpack.c.l.b16 %v1857
    %v2121 = vunpack.c.h.b16 %v1857
    %v2122 = vunpack.c.l.b16 %v1858
    %v2123 = vunpack.c.h.b16 %v1858
    %v2124 = vunpack.c.l.b16 %v1859
    %v2125 = vunpack.c.h.b16 %v1859
    %v2126 = vunpack.c.l.b16 %v1860
    %v2127 = vunpack.c.h.b16 %v1860
    %v2128 = vunpack.c.l.b16 %v1861
    %v2129 = vunpack.c.h.b16 %v1861
    %v2130 = vunpack.c.l.b16 %v1862
    %v2131 = vunpack.c.h.b16 %v1862
    %v2132 = vunpack.c.l.b16 %v1863
    %v2133 = vunpack.c.h.b16 %v1863
    %v2134 = vunpack.c.l.b16 %v1864
    %v2135 = vunpack.c.h.b16 %v1864
    %v2136 = vunpack.c.l.b16 %v1865
    %v2137 = vunpack.c.h.b16 %v1865
    %v2138 = vunpack.c.l.b16 %v1866
    %v2139 = vunpack.c.h.b16 %v1866
    %v2140 = vunpack.c.l.b16 %v1867
    %v2141 = vunpack.c.h.b16 %v1867
    %v2142 = vunpack.c.l.b16 %v1868
    %v2143 = vunpack.c.h.b16 %v1868
    %v2144 = vunpack.c.l.b16 %v1869
    %v2145 = vunpack.c.h.b16 %v1869
    %v2146 = vunpack.c.l.b16 %v1870
    %v2147 = vunpack.c.h.b16 %v1870
    %v2148 = vunpack.c.l.b16 %v1871
    %v2149 = vunpack.c.h.b16 %v1871
    %v2150 = vunpack.c.l.b16 %v1872
    %v2151 = vunpack.c.h.b16 %v1872
    %v2152 = vunpack.c.l.b16 %v1873
    %v2153 = vunpack.c.h.b16 %v1873
    %v2154 = vunpack.c.l.b16 %v1874
    %v2155 = vunpack.c.h.b16 %v1874
    %v2156 = vunpack.c.l.b16 %v1875
    %v2157 = vunpack.c.h.b16 %v1875
    %v2158 = vunpack.c.l.b16 %v1876
    %v2159 = vunpack.c.h.b16 %v1876
    %v2160 = vunpack.c.l.b16 %v1877
    %v2161 = vunpack.c.h.b16 %v1877
    %v2162 = vunpack.c.l.b16 %v1878
    %v2163 = vunpack.c.h.b16 %v1878
    %v2164 = vunpack.c.l.b16 %v1879
    %v2165 = vunpack.c.h.b16 %v1879
    %v2166 = vunpack.c.l.b16 %v1880
    %v2167 = vunpack.c.h.b16 %v1880
    %v2168 = vunpack.c.l.b16 %v1881
    %v2169 = vunpack.c.h.b16 %v1881
    %v2170 = vunpack.c.l.b16 %v1882
    %v2171 = vunpack.c.h.b16 %v1882
    %v2172 = vunpack.c.l.b16 %v1883
    %v2173 = vunpack.c.h.b16 %v1883
    %v2174 = vunpack.c.l.b16 %v1884
    %v2175 = vunpack.c.h.b16 %v1884
    %v2176 = vunpack.c.l.b16 %v1885
    %v2177 = vunpack.c.h.b16 %v1885
    %v2178 = vunpack.c.l.b16 %v1886
    %v2179 = vunpack.c.h.b16 %v1886
    %v2180 = vunpack.c.l.b16 %v1887
    %v2181 = vunpack.c.h.b16 %v1887
    %v2182 = vunpack.c.l.b16 %v1888
    %v2183 = vunpack.c.h.b16 %v1888
    %v2184 = vunpack.c.l.b16 %v1889
    %v2185 = vunpack.c.h.b16 %v1889
    %v2186 = vunpack.c.l.b16 %v1890
    %v2187 = vunpack.c.h.b16 %v1890
    %v2188 = vunpack.c.l.b16 %v1891
    %v2189 = vunpack.c.h.b16 %v1891
    %v2190 = vunpack.c.l.b16 %v1892
    %v2191 = vunpack.c.h.b16 %v1892
    %v2192 = vunpack.c.l.b16 %v1893
    %v2193 = vunpack.c.h.b16 %v1893
    %v2194 = vunpack.c.l.b16 %v1894
    %v2195 = vunpack.c.h.b16 %v1894
    %v2196 = vunpack.c.l.b16 %v1895
    %v2197 = vunpack.c.h.b16 %v1895
    %v2198 = vunpack.c.l.b16 %v1896
    %v2199 = vunpack.c.h.b16 %v1896
    %v2200 = vunpack.c.l.b16 %v1897
    %v2201 = vunpack.c.h.b16 %v1897
    %v2202 = vunpack.c.l.b16 %v1898
    %v2203 = vunpack.c.h.b16 %v1898
    %v2204 = vunpack.c.l.b16 %v1899
    %v2205 = vunpack.c.h.b16 %v1899
    %v2206 = vunpack.c.l.b16 %v1900
    %v2207 = vunpack.c.h.b16 %v1900
    %v2208 = vunpack.c.l.b16 %v1901
    %v2209 = vunpack.c.h.b16 %v1901
    %v2210 = vunpack.c.l.b16 %v1902
    %v2211 = vunpack.c.h.b16 %v1902
    %v2212 = vunpack.c.l.b16 %v1903
    %v2213 = vunpack.c.h.b16 %v1903
    %v2214 = vunpack.c.l.b16 %v1904
    %v2215 = vunpack.c.h.b16 %v1904
    %v2216 = vunpack.c.l.b16 %v1905
    %v2217 = vunpack.c.h.b16 %v1905
    %v2218 = vunpack.c.l.b16 %v1906
    %v2219 = vunpack.c.h.b16 %v1906
    %v2220 = vunpack.c.l.b16 %v1907
    %v2221 = vunpack.c.h.b16 %v1907
    %v2222 = vunpack.c.l.b16 %v1908
    %v2223 = vunpack.c.h.b16 %v1908
    %v2224 = vunpack.c.l.b16 %v1909
    %v2225 = vunpack.c.h.b16 %v1909
    %v2226 = vunpack.c.l.b16 %v1910
    %v2227 = vunpack.c.h.b16 %v1910
    %v2228 = vunpack.c.l.b16 %v1911
    %v2229 = vunpack.c.h.b16 %v1911
    %v2230 = vunpack.c.l.b16 %v1912
    %v2231 = vunpack.c.h.b16 %v1912
    %v2232 = vunpack.c.l.b16 %v1913
    %v2233 = vunpack.c.h.b16 %v1913
    %v2234 = vunpack.c.l.b16 %v1914
    %v2235 = vunpack.c.h.b16 %v1914
    %v2236 = vunpack.c.l.b16 %v1915
    %v2237 = vunpack.c.h.b16 %v1915
    %v2238 = vunpack.c.l.b16 %v1916
    %v2239 = vunpack.c.h.b16 %v1916
    %v2240 = vunpack.c.l.b16 %v1917
    %v2241 = vunpack.c.h.b16 %v1917
    %v2242 = vunpack.c.l.b16 %v1918
    %v2243 = vunpack.c.h.b16 %v1918
    %v2244 = vunpack.c.l.b16 %v1919
    %v2245 = vunpack.c.h.b16 %v1919
    %v2246 = vunpack.c.l.b16 %v1920
    %v2247 = vunpack.c.h.b16 %v1920
    %v2248 = vunpack.c.l.b16 %v1921
    %v2249 = vunpack.c.h.b16 %v1921
    %v2250 = vunpack.c.l.b16 %v1922
    %v2251 = vunpack.c.h.b16 %v1922
    %v2252 = vunpack.c.l.b16 %v1923
    %v2253 = vunpack.c.h.b16 %v1923
    %v2254 = vunpack.c.l.b16 %v1924
    %v2255 = vunpack.c.h.b16 %v1924
    %v2256 = vunpack.c.l.b16 %v1925
    %v2257 = vunpack.c.h.b16 %v1925
    %v2258 = vunpack.c.l.b16 %v1926
    %v2259 = vunpack.c.h.b16 %v1926
    %v2260 = vunpack.c.l.b16 %v1927
    %v2261 = vunpack.c.h.b16 %v1927
    %v2262 = vunpack.c.l.b16 %v1928
    %v2263 = vunpack.c.h.b16 %v1928
    %v2264 = vunpack.c.l.b16 %v1929
    %v2265 = vunpack.c.h.b16 %v1929
    %v2266 = vunpack.c.l.b16 %v1930
    %v2267 = vunpack.c.h.b16 %v1930
    %v2268 = vunpack.c.l.b16 %v1931
    %v2269 = vunpack.c.h.b16 %v1931
    %v2270 = vunpack.c.l.b16 %v1932
    %v2271 = vunpack.c.h.b16 %v1932
    %v2272 = vunpack.c.l.b16 %v1933
    %v2273 = vunpack.c.h.b16 %v1933
    %v2274 = vunpack.c.l.b16 %v1934
    %v2275 = vunpack.c.h.b16 %v1934
    %v2276 = vunpack.c.l.b16 %v1935
    %v2277 = vunpack.c.h.b16 %v1935
    %v2278 = vunpack.c.l.b16 %v1936
    %v2279 = vunpack.c.h.b16 %v1936
    %v2280 = vunpack.c.l.b16 %v1937
    %v2281 = vunpack.c.h.b16 %v1937
    %v2282 = vunpack.c.l.b16 %v1938
    %v2283 = vunpack.c.h.b16 %v1938
    %v2284 = vunpack.c.l.b16 %v1939
    %v2285 = vunpack.c.h.b16 %v1939
    %v2286 = vunpack.c.l.b16 %v1940
    %v2287 = vunpack.c.h.b16 %v1940
    %v2288 = vunpack.c.l.b16 %v1941
    %v2289 = vunpack.c.h.b16 %v1941
    %v2290 = vpack.c.b16 %v2068, %v2066
    %v2291 = vpack.c.b16 %v2069, %v2067
    %v2292 = vpack.c.b16 %v2072, %v2070
    %v2293 = vpack.c.b16 %v2073, %v2071
    %v2294 = vpack.c.b16 %v2076, %v2074
    %v2295 = vpack.c.b16 %v2077, %v2075
    %v2296 = vpack.c.b16 %v2080, %v2078
    %v2297 = vpack.c.b16 %v2081, %v2079
    %v2298 = vpack.c.b16 %v2084, %v2082
    %v2299 = vpack.c.b16 %v2085, %v2083
    %v2300 = vpack.c.b16 %v2088, %v2086
    %v2301 = vpack.c.b16 %v2089, %v2087
    %v2302 = vpack.c.b16 %v2092, %v2090
    %v2303 = vpack.c.b16 %v2093, %v2091
    %v2304 = vpack.c.b16 %v2096, %v2094
    %v2305 = vpack.c.b16 %v2097, %v2095
    %v2306 = vpack.c.b16 %v2100, %v2098
    %v2307 = vpack.c.b16 %v2101, %v2099
    %v2308 = vpack.c.b16 %v2104, %v2102
    %v2309 = vpack.c.b16 %v2105, %v2103
    %v2310 = vpack.c.b16 %v2108, %v2106
    %v2311 = vpack.c.b16 %v2109, %v2107
    %v2312 = vpack.c.b16 %v2112, %v2110
    %v2313 = vpack.c.b16 %v2113, %v2111
    %v2314 = vpack.c.b16 %v2116, %v2114
    %v2315 = vpack.c.b16 %v2117, %v2115
    %v2316 = vpack.c.b16 %v2120, %v2118
    %v2317 = vpack.c.b16 %v2121, %v2119
    %v2318 = vpack.c.b16 %v2124, %v2122
    %v2319 = vpack.c.b16 %v2125, %v2123
    %v2320 = vpack.c.b16 %v2128, %v2126
    %v2321 = vpack.c.b16 %v2129, %v2127
    %v2322 = vpack.c.b16 %v2132, %v2130
    %v2323 = vpack.c.b16 %v2133, %v2131
    %v2324 = vpack.c.b16 %v2136, %v2134
    %v2325 = vpack.c.b16 %v2137, %v2135
    %v2326 = vpack.c.b16 %v2140, %v2138
    %v2327 = vpack.c.b16 %v2141, %v2139
    %v2328 = vpack.c.b16 %v2144, %v2142
    %v2329 = vpack.c.b16 %v2145, %v2143
    %v2330 = vpack.c.b16 %v2148, %v2146
    %v2331 = vpack.c.b16 %v2149, %v2147
    %v2332 = vpack.c.b16 %v2152, %v2150
    %v2333 = vpack.c.b16 %v2153, %v2151
    %v2334 = vpack.c.b16 %v2156, %v2154
    %v2335 = vpack.c.b16 %v2157, %v2155
    %v2336 = vpack.c.b16 %v2160, %v2158
    %v2337 = vpack.c.b16 %v2161, %v2159
    %v2338 = vpack.c.b16 %v2164, %v2162
    %v2339 = vpack.c.b16 %v2165, %v2163
    %v2340 = vpack.c.b16 %v2168, %v2166
    %v2341 = vpack.c.b16 %v2169, %v2167
    %v2342 = vpack.c.b16 %v2172, %v2170
    %v2343 = vpack.c.b16 %v2173, %v2171
    %v2344 = vpack.c.b16 %v2176, %v2174
    %v2345 = vpack.c.b16 %v2177, %v2175
    %v2346 = vpack.c.b16 %v2180, %v2178
    %v2347 = vpack.c.b16 %v2181, %v2179
    %v2348 = vpack.c.b16 %v2184, %v2182
    %v2349 = vpack.c.b16 %v2185, %v2183
    %v2350 = vpack.c.b16 %v2188, %v2186
    %v2351 = vpack.c.b16 %v2189, %v2187
    %v2352 = vpack.c.b16 %v2192, %v2190
    %v2353 = vpack.c.b16 %v2193, %v2191
    %v2354 = vpack.c.b16 %v2196, %v2194
    %v2355 = vpack.c.b16 %v2197, %v2195
    %v2356 = vpack.c.b16 %v2200, %v2198
    %v2357 = vpack.c.b16 %v2201, %v2199
    %v2358 = vpack.c.b16 %v2204, %v2202
    %v2359 = vpack.c.b16 %v2205, %v2203
    %v2360 = vpack.c.b16 %v2208, %v2206
    %v2361 = vpack.c.b16 %v2209, %v2207
    %v2362 = vpack.c.b16 %v2212, %v2210
    %v2363 = vpack.c.b16 %v2213, %v2211
    %v2364 = vpack.c.b16 %v2216, %v2214
    %v2365 = vpack.c.b16 %v2217, %v2215
    %v2366 = vpack.c.b16 %v2220, %v2218
    %v2367 = vpack.c.b16 %v2221, %v2219
    %v2368 = vpack.c.b16 %v2224, %v2222
    %v2369 = vpack.c.b16 %v2225, %v2223
    %v2370 = vpack.c.b16 %v2228, %v2226
    %v2371 = vpack.c.b16 %v2229, %v2227
    %v2372 = vpack.c.b16 %v2232, %v2230
    %v2373 = vpack.c.b16 %v2233, %v2231
    %v2374 = vpack.c.b16 %v2236, %v2234
    %v2375 = vpack.c.b16 %v2237, %v2235
    %v2376 = vpack.c.b16 %v2240, %v2238
    %v2377 = vpack.c.b16 %v2241, %v2239
    %v2378 = vpack.c.b16 %v2244, %v2242
    %v2379 = vpack.c.b16 %v2245, %v2243
    %v2380 = vpack.c.b16 %v2248, %v2246
    %v2381 = vpack.c.b16 %v2249, %v2247
    %v2382 = vpack.c.b16 %v2252, %v2250
    %v2383 = vpack.c.b16 %v2253, %v2251
    %v2384 = vpack.c.b16 %v2256, %v2254
    %v2385 = vpack.c.b16 %v2257, %v2255
    %v2386 = vpack.c.b16 %v2260, %v2258
    %v2387 = vpack.c.b16 %v2261, %v2259
    %v2388 = vpack.c.b16 %v2264, %v2262
    %v2389 = vpack.c.b16 %v2265, %v2263
    %v2390 = vpack.c.b16 %v2268, %v2266
    %v2391 = vpack.c.b16 %v2269, %v2267
    %v2392 = vpack.c.b16 %v2272, %v2270
    %v2393 = vpack.c.b16 %v2273, %v2271
    %v2394 = vpack.c.b16 %v2276, %v2274
    %v2395 = vpack.c.b16 %v2277, %v2275
    %v2396 = vpack.c.b16 %v2280, %v2278
    %v2397 = vpack.c.b16 %v2281, %v2279
    %v2398 = vpack.c.b16 %v2284, %v2282
    %v2399 = vpack.c.b16 %v2285, %v2283
    %v2400 = vpack.c.b16 %v2288, %v2286
    %v2401 = vpack.c.b16 %v2289, %v2287
    %2514 = vmatprep.subr.bf16.mxu0 %v2305
    %2515 = vmatpush1.bf16.msra.mxu0 %v2304
    %2516 = vmatprep.subr.bf16.mxu0 %v2303
    %2517 = vmatpush1.bf16.msra.mxu0 %v2302
    %2518 = vmatprep.subr.bf16.mxu0 %v2301
    %2519 = vmatpush1.bf16.msra.mxu0 %v2300
    %2520 = vmatprep.subr.bf16.mxu0 %v2299
    %2521 = vmatpush1.bf16.msra.mxu0 %v2298
    %2522 = vmatprep.subr.bf16.mxu0 %v2297
    %2523 = vmatpush1.bf16.msra.mxu0 %v2296
    %2524 = vmatprep.subr.bf16.mxu0 %v2295
    %2525 = vmatpush1.bf16.msra.mxu0 %v2294
    %2526 = vmatprep.subr.bf16.mxu0 %v2293
    %2527 = vmatpush1.bf16.msra.mxu0 %v2292
    %2528 = vmatprep.subr.bf16.mxu0 %v2291
    %2529 = vmatpush1.bf16.msra.mxu0 %v2290
    %2530 = vmatprep.subr.bf16.mxu0 %v2321
    %2531 = vmatpush2.bf16.msra.mxu0 %v2320
    %2532 = vmatprep.subr.bf16.mxu0 %v2319
    %2533 = vmatpush2.bf16.msra.mxu0 %v2318
    %2534 = vmatprep.subr.bf16.mxu0 %v2317
    %2535 = vmatpush2.bf16.msra.mxu0 %v2316
    %2536 = vmatprep.subr.bf16.mxu0 %v2315
    %2537 = vmatpush2.bf16.msra.mxu0 %v2314
    %2538 = vmatprep.subr.bf16.mxu0 %v2313
    %2539 = vmatpush2.bf16.msra.mxu0 %v2312
    %2540 = vmatprep.subr.bf16.mxu0 %v2311
    %2541 = vmatpush2.bf16.msra.mxu0 %v2310
    %2542 = vmatprep.subr.bf16.mxu0 %v2309
    %2543 = vmatpush2.bf16.msra.mxu0 %v2308
    %2544 = vmatprep.subr.bf16.mxu0 %v2307
    %2545 = vmatpush2.bf16.msra.mxu0 %v2306
    %2546 = vmatprep.mubr.bf16.mxu0 %v1824
    %2547 = vmatmul.mubr.bf16.gmra.mxu0 %v1823
    %v2548 = vpop.f32.mrf.mxu0
    %v2549 = vadd.f32 %v1947, %v2548
    %v2550 = vpop.f32.mrf.mxu0
    %v2551 = vadd.f32 %v1951, %v2550
    %v2552 = vpop.f32.mrf.mxu0
    %v2553 = vpop.f32.mrf.mxu0
    %2554 = vdwg.mxu0
    %2555 = vmatprep.subr.bf16.mxu0 %v2337
    %2556 = vmatpush1.bf16.msra.mxu0 %v2336
    %2557 = vmatprep.subr.bf16.mxu0 %v2335
    %2558 = vmatpush1.bf16.msra.mxu0 %v2334
    %2559 = vmatprep.subr.bf16.mxu0 %v2333
    %2560 = vmatpush1.bf16.msra.mxu0 %v2332
    %2561 = vmatprep.subr.bf16.mxu0 %v2331
    %2562 = vmatpush1.bf16.msra.mxu0 %v2330
    %2563 = vmatprep.subr.bf16.mxu0 %v2329
    %2564 = vmatpush1.bf16.msra.mxu0 %v2328
    %2565 = vmatprep.subr.bf16.mxu0 %v2327
    %2566 = vmatpush1.bf16.msra.mxu0 %v2326
    %2567 = vmatprep.subr.bf16.mxu0 %v2325
    %2568 = vmatpush1.bf16.msra.mxu0 %v2324
    %2569 = vmatprep.subr.bf16.mxu0 %v2323
    %2570 = vmatpush1.bf16.msra.mxu0 %v2322
    %2571 = vmatprep.subr.bf16.mxu0 %v2353
    %2572 = vmatpush2.bf16.msra.mxu0 %v2352
    %2573 = vmatprep.subr.bf16.mxu0 %v2351
    %2574 = vmatpush2.bf16.msra.mxu0 %v2350
    %2575 = vmatprep.subr.bf16.mxu0 %v2349
    %2576 = vmatpush2.bf16.msra.mxu0 %v2348
    %2577 = vmatprep.subr.bf16.mxu0 %v2347
    %2578 = vmatpush2.bf16.msra.mxu0 %v2346
    %2579 = vmatprep.subr.bf16.mxu0 %v2345
    %2580 = vmatpush2.bf16.msra.mxu0 %v2344
    %2581 = vmatprep.subr.bf16.mxu0 %v2343
    %2582 = vmatpush2.bf16.msra.mxu0 %v2342
    %2583 = vmatprep.subr.bf16.mxu0 %v2341
    %2584 = vmatpush2.bf16.msra.mxu0 %v2340
    %2585 = vmatprep.subr.bf16.mxu0 %v2339
    %2586 = vmatpush2.bf16.msra.mxu0 %v2338
    %2587 = vmatprep.mubr.bf16.mxu0 %v1826
    %2588 = vmatmul.mubr.bf16.gmra.mxu0 %v1825
    %v2589 = vpop.f32.mrf.mxu0
    %v2590 = vadd.f32 %v2549, %v2589
    %v2591 = vpop.f32.mrf.mxu0
    %v2592 = vadd.f32 %v2551, %v2591
    %v2593 = vpop.f32.mrf.mxu0
    %v2594 = vpop.f32.mrf.mxu0
    %2595 = vdwg.mxu0
    %2596 = vmatprep.subr.bf16.mxu0 %v2369
    %2597 = vmatpush1.bf16.msra.mxu0 %v2368
    %2598 = vmatprep.subr.bf16.mxu0 %v2367
    %2599 = vmatpush1.bf16.msra.mxu0 %v2366
    %2600 = vmatprep.subr.bf16.mxu0 %v2365
    %2601 = vmatpush1.bf16.msra.mxu0 %v2364
    %2602 = vmatprep.subr.bf16.mxu0 %v2363
    %2603 = vmatpush1.bf16.msra.mxu0 %v2362
    %2604 = vmatprep.subr.bf16.mxu0 %v2361
    %2605 = vmatpush1.bf16.msra.mxu0 %v2360
    %2606 = vmatprep.subr.bf16.mxu0 %v2359
    %2607 = vmatpush1.bf16.msra.mxu0 %v2358
    %2608 = vmatprep.subr.bf16.mxu0 %v2357
    %2609 = vmatpush1.bf16.msra.mxu0 %v2356
    %2610 = vmatprep.subr.bf16.mxu0 %v2355
    %2611 = vmatpush1.bf16.msra.mxu0 %v2354
    %2612 = vmatprep.subr.bf16.mxu0 %v2385
    %2613 = vmatpush2.bf16.msra.mxu0 %v2384
    %2614 = vmatprep.subr.bf16.mxu0 %v2383
    %2615 = vmatpush2.bf16.msra.mxu0 %v2382
    %2616 = vmatprep.subr.bf16.mxu0 %v2381
    %2617 = vmatpush2.bf16.msra.mxu0 %v2380
    %2618 = vmatprep.subr.bf16.mxu0 %v2379
    %2619 = vmatpush2.bf16.msra.mxu0 %v2378
    %2620 = vmatprep.subr.bf16.mxu0 %v2377
    %2621 = vmatpush2.bf16.msra.mxu0 %v2376
    %2622 = vmatprep.subr.bf16.mxu0 %v2375
    %2623 = vmatpush2.bf16.msra.mxu0 %v2374
    %2624 = vmatprep.subr.bf16.mxu0 %v2373
    %2625 = vmatpush2.bf16.msra.mxu0 %v2372
    %2626 = vmatprep.subr.bf16.mxu0 %v2371
    %2627 = vmatpush2.bf16.msra.mxu0 %v2370
    %2628 = vmatprep.mubr.bf16.mxu0 %v1828
    %2629 = vmatmul.mubr.bf16.gmra.mxu0 %v1827
    %v2630 = vpop.f32.mrf.mxu0
    %v2631 = vadd.f32 %v2590, %v2630
    %v2632 = vpop.f32.mrf.mxu0
    %v2633 = vadd.f32 %v2592, %v2632
    %v2634 = vpop.f32.mrf.mxu0
    %v2635 = vpop.f32.mrf.mxu0
    %2636 = vdwg.mxu0
    %2637 = vmatprep.subr.bf16.mxu0 %v2401
    %2638 = vmatpush1.bf16.msra.mxu0 %v2400
    %2639 = vmatprep.subr.bf16.mxu0 %v2399
    %2640 = vmatpush1.bf16.msra.mxu0 %v2398
    %2641 = vmatprep.subr.bf16.mxu0 %v2397
    %2642 = vmatpush1.bf16.msra.mxu0 %v2396
    %2643 = vmatprep.subr.bf16.mxu0 %v2395
    %2644 = vmatpush1.bf16.msra.mxu0 %v2394
    %2645 = vmatprep.subr.bf16.mxu0 %v2393
    %2646 = vmatpush1.bf16.msra.mxu0 %v2392
    %2647 = vmatprep.subr.bf16.mxu0 %v2391
    %2648 = vmatpush1.bf16.msra.mxu0 %v2390
    %2649 = vmatprep.subr.bf16.mxu0 %v2389
    %2650 = vmatpush1.bf16.msra.mxu0 %v2388
    %2651 = vmatprep.subr.bf16.mxu0 %v2387
    %2652 = vmatpush1.bf16.msra.mxu0 %v2386
    %2653 = vmatprep.subr.bf16.mxu0 0
    %2654 = vmatpush2.bf16.msra.mxu0 0
    %2655 = vmatprep.subr.bf16.mxu0 0
    %2656 = vmatpush2.bf16.msra.mxu0 0
    %2657 = vmatprep.subr.bf16.mxu0 0
    %2658 = vmatpush2.bf16.msra.mxu0 0
    %2659 = vmatprep.subr.bf16.mxu0 0
    %2660 = vmatpush2.bf16.msra.mxu0 0
    %2661 = vmatprep.subr.bf16.mxu0 0
    %2662 = vmatpush2.bf16.msra.mxu0 0
    %2663 = vmatprep.subr.bf16.mxu0 0
    %2664 = vmatpush2.bf16.msra.mxu0 0
    %2665 = vmatprep.subr.bf16.mxu0 0
    %2666 = vmatpush2.bf16.msra.mxu0 0
    %2667 = vmatprep.subr.bf16.mxu0 0
    %2668 = vmatpush2.bf16.msra.mxu0 0
    %2669 = vmatprep.mubr.bf16.mxu0 0
    %2670 = vmatmul.mubr.bf16.gmra.mxu0 %v1829
    %v2671 = vpop.f32.mrf.mxu0
    %v2672 = vadd.f32 %v2631, %v2671
    %v2673 = vpop.f32.mrf.mxu0
    %v2674 = vadd.f32 %v2633, %v2673
    %v2675 = vpop.f32.mrf.mxu0
    %v2676 = vpop.f32.mrf.mxu0
    %2677 = vdwg.mxu0
    %v2678 = vmax.f32 %v2672, 0.0
    %v2679 = vmax.f32 %v2674, 0.0
    %v2680 = vpack.c.bf16 %v2678, %v2678
    %v2681 = vpack.c.bf16 %v2679, %v2679
    %v2682 = vld [vmem:[%s5] sm:$0xf]
    %v2683 = vld [vmem:[%s5 + $0x4] sm:$0xf]
    %v2684 = vld [vmem:[%s5 + $0x8] sm:$0xf]
    %v2685 = vld [vmem:[%s5 + $0xc] sm:$0xf]
    %v2686 = vld [vmem:[%s5 + $0x10] sm:$0xf]
    %v2687 = vld [vmem:[%s5 + $0x14] sm:$0xf]
    %v2688 = vld [vmem:[%s5 + $0x18] sm:$0xf]
    %v2689 = vld [vmem:[%s5 + $0x1c] sm:$0xf]
    %v2690 = vld [vmem:[%s5 + $0x20] sm:$0xf]
    %v2691 = vld [vmem:[%s5 + $0x24] sm:$0xf]
    %v2692 = vld [vmem:[%s5 + $0x28] sm:$0xf]
    %v2693 = vld [vmem:[%s5 + $0x2c] sm:$0xf]
    %v2694 = vld [vmem:[%s5 + $0x30] sm:$0xf]
    %v2695 = vld [vmem:[%s5 + $0x34] sm:$0xf]
    %v2696 = vld [vmem:[%s5 + $0x38] sm:$0xf]
    %v2697 = vld [vmem:[%s5 + $0x3c] sm:$0xf]
    %v2698 = vld [vmem:[%s5 + $0x40] sm:$0xf]
    %v2699 = vld [vmem:[%s5 + $0x44] sm:$0xf]
    %v2700 = vld [vmem:[%s5 + $0x48] sm:$0xf]
    %v2701 = vld [vmem:[%s5 + $0x4c] sm:$0xf]
    %v2702 = vld [vmem:[%s5 + $0x50] sm:$0xf]
    %v2703 = vld [vmem:[%s5 + $0x54] sm:$0xf]
    %v2704 = vld [vmem:[%s5 + $0x58] sm:$0xf]
    %v2705 = vld [vmem:[%s5 + $0x5c] sm:$0xf]
    %v2706 = vld [vmem:[%s5 + $0x60] sm:$0xf]
    %v2707 = vld [vmem:[%s5 + $0x64] sm:$0xf]
    %v2708 = vld [vmem:[%s5 + $0x68] sm:$0xf]
    %v2709 = vld [vmem:[%s5 + $0x6c] sm:$0xf]
    %v2710 = vld [vmem:[%s5 + $0x70] sm:$0xf]
    %v2711 = vld [vmem:[%s5 + $0x74] sm:$0xf]
    %v2712 = vld [vmem:[%s5 + $0x78] sm:$0xf]
    %v2713 = vld [vmem:[%s5 + $0x7c] sm:$0xf]
    %v2714 = vld [vmem:[%s6] sm:$0x1]
    %v2716 = vlaneseq
    %v2717 = vshrl.u32 %v2716, 7
    %v2718 = vsub.s32 0, %v2717
    %v2719 = vrot.slane %v2714, %v2718
    %v2753 = vunpack.c.l.b16 %v2682
    %v2754 = vunpack.c.l.b16 %v2683
    %v2755 = vunpack.c.l.b16 %v2684
    %v2756 = vunpack.c.l.b16 %v2685
    %v2757 = vunpack.c.l.b16 %v2686
    %v2758 = vunpack.c.l.b16 %v2687
    %v2759 = vunpack.c.l.b16 %v2688
    %v2760 = vunpack.c.l.b16 %v2689
    %v2761 = vunpack.c.l.b16 %v2690
    %v2762 = vunpack.c.l.b16 %v2691
    %v2763 = vunpack.c.l.b16 %v2692
    %v2764 = vunpack.c.l.b16 %v2693
    %v2765 = vunpack.c.l.b16 %v2694
    %v2766 = vunpack.c.l.b16 %v2695
    %v2767 = vunpack.c.l.b16 %v2696
    %v2768 = vunpack.c.l.b16 %v2697
    %v2769 = vunpack.c.l.b16 %v2698
    %v2770 = vunpack.c.l.b16 %v2699
    %v2771 = vunpack.c.l.b16 %v2700
    %v2772 = vunpack.c.l.b16 %v2701
    %v2773 = vunpack.c.l.b16 %v2702
    %v2774 = vunpack.c.l.b16 %v2703
    %v2775 = vunpack.c.l.b16 %v2704
    %v2776 = vunpack.c.l.b16 %v2705
    %v2777 = vunpack.c.l.b16 %v2706
    %v2778 = vunpack.c.l.b16 %v2707
    %v2779 = vunpack.c.l.b16 %v2708
    %v2780 = vunpack.c.l.b16 %v2709
    %v2781 = vunpack.c.l.b16 %v2710
    %v2782 = vunpack.c.l.b16 %v2711
    %v2783 = vunpack.c.l.b16 %v2712
    %v2784 = vunpack.c.l.b16 %v2713
    %v2785 = vpack.c.b16 %v2754, %v2753
    %v2786 = vpack.c.b16 %v2756, %v2755
    %v2787 = vpack.c.b16 %v2758, %v2757
    %v2788 = vpack.c.b16 %v2760, %v2759
    %v2789 = vpack.c.b16 %v2762, %v2761
    %v2790 = vpack.c.b16 %v2764, %v2763
    %v2791 = vpack.c.b16 %v2766, %v2765
    %v2792 = vpack.c.b16 %v2768, %v2767
    %v2793 = vpack.c.b16 %v2770, %v2769
    %v2794 = vpack.c.b16 %v2772, %v2771
    %v2795 = vpack.c.b16 %v2774, %v2773
    %v2796 = vpack.c.b16 %v2776, %v2775
    %v2797 = vpack.c.b16 %v2778, %v2777
    %v2798 = vpack.c.b16 %v2780, %v2779
    %v2799 = vpack.c.b16 %v2782, %v2781
    %v2800 = vpack.c.b16 %v2784, %v2783
    %2817 = vmatprep.subr.bf16.mxu0 0
    %2818 = vmatpush1.bf16.msra.mxu0 %v2792
    %2819 = vmatprep.subr.bf16.mxu0 0
    %2820 = vmatpush1.bf16.msra.mxu0 %v2791
    %2821 = vmatprep.subr.bf16.mxu0 0
    %2822 = vmatpush1.bf16.msra.mxu0 %v2790
    %2823 = vmatprep.subr.bf16.mxu0 0
    %2824 = vmatpush1.bf16.msra.mxu0 %v2789
    %2825 = vmatprep.subr.bf16.mxu0 0
    %2826 = vmatpush1.bf16.msra.mxu0 %v2788
    %2827 = vmatprep.subr.bf16.mxu0 0
    %2828 = vmatpush1.bf16.msra.mxu0 %v2787
    %2829 = vmatprep.subr.bf16.mxu0 0
    %2830 = vmatpush1.bf16.msra.mxu0 %v2786
    %2831 = vmatprep.subr.bf16.mxu0 0
    %2832 = vmatpush1.bf16.msra.mxu0 %v2785
    %2833 = vmatprep.subr.bf16.mxu0 0
    %2834 = vmatpush2.bf16.msra.mxu0 %v2800
    %2835 = vmatprep.subr.bf16.mxu0 0
    %2836 = vmatpush2.bf16.msra.mxu0 %v2799
    %2837 = vmatprep.subr.bf16.mxu0 0
    %2838 = vmatpush2.bf16.msra.mxu0 %v2798
    %2839 = vmatprep.subr.bf16.mxu0 0
    %2840 = vmatpush2.bf16.msra.mxu0 %v2797
    %2841 = vmatprep.subr.bf16.mxu0 0
    %2842 = vmatpush2.bf16.msra.mxu0 %v2796
    %2843 = vmatprep.subr.bf16.mxu0 0
    %2844 = vmatpush2.bf16.msra.mxu0 %v2795
    %2845 = vmatprep.subr.bf16.mxu0 0
    %2846 = vmatpush2.bf16.msra.mxu0 %v2794
    %2847 = vmatprep.subr.bf16.mxu0 0
    %2848 = vmatpush2.bf16.msra.mxu0 %v2793
    %2849 = vmatprep.mubr.bf16.mxu0 %v2681
    %2850 = vmatmul.mubr.bf16.gmra.mxu0 %v2680
    %v2851 = vpop.f32.mrf.mxu0
    %v2852 = vadd.f32 %v2719, %v2851
    %v2853 = vpop.f32.mrf.mxu0
    %v2854 = vpop.f32.mrf.mxu0
    %v2855 = vpop.f32.mrf.mxu0
    %2856 = vdwg.mxu0
    %2857 = vst [vmem:[%s7] sm:$0xff] %v2852
    // Predicated region
    $region38: #{cnn_forward.1} parent=1 // pred_check
      _
    $region39: #{cnn_forward.1} parent=1 // pred_check_branch
      %2859 = sbr.rel (0) target = $region41
    $region40: #{cnn_forward.1} parent=1 // pred_region
      _
    $region41: #{cnn_forward.1} parent=1 // pred_fallthru
      _
    // Predicated region
    $region42: #{cnn_forward.1} parent=1 // pred_check
      _
    $region43: #{cnn_forward.1} parent=1 // pred_check_branch
      %2861 = sbr.rel (0) target = $region45
    $region44: #{cnn_forward.1} parent=1 // pred_region
      _
    $region45: #{cnn_forward.1} parent=1 // pred_fallthru
      _
    %2862 = vsyncpa [#allocation3], 1
    %2863 = vsyncpa [#allocation5], 1

</llo_original>
